<compile_context>
chip_gen: v7x
topology: tpu7x:2x2x1
jax: 0.10.0
libtpu: 0.0.40
codegen_flags: <defaults>
</compile_context>

<pallas_src>
import functools
import math

import jax
import jax.numpy as jnp
from jax import lax
from jax.experimental import pallas as pl
from jax.experimental.pallas import tpu as pltpu


def _pick_batch_tile(batch, seq, target_rows=256, max_rows=1024):
    """Largest divisor Bt of `batch` with Bt*seq <= max_rows (stop once >= target_rows)."""
    best = 1
    for bt in range(1, batch + 1):
        if batch % bt != 0 or bt * seq > max_rows:
            continue
        best = bt
        if bt * seq >= target_rows:
            break
    return best


def _eqv_attn_kernel(y_ref, xp_ref, wqkv_ref, bqkv_ref, wo_ref, bo_ref,
                     coef_ref, maskv_ref, o_ref, *, num_heads, dim_v, seq_len,
                     batch_tile):
    """One grid step == Bt batch elements. f32 compute, heads lane-packed."""
    H = num_heads
    D = dim_v
    N = seq_len
    Bt = batch_tile

    y = y_ref[...]                                                   # (Bt*N, D)

    # Fused QKV projection on the packed row slab (1/sqrt(D) folded into the Q slice).
    qkv = jnp.dot(y, wqkv_ref[...], preferred_element_type=jnp.float32) + bqkv_ref[...]
    q = qkv[:, :D].reshape(Bt, N, D)                                 # pre-scaled
    k = qkv[:, D:2 * D].reshape(Bt, N, D)
    v = qkv[:, 2 * D:].reshape(Bt, N, D)

    # Head-replicated K/V with a block-diagonal head mask: packed key row h*N+m keeps
    # only the channels of head h, so per-head attention becomes batched dense matmuls.
    maskv = maskv_ref[...]                                           # (H*N, D)
    kb = jnp.concatenate([k] * H, axis=1) * maskv[None]              # (Bt, H*N, D)
    vb = jnp.concatenate([v] * H, axis=1) * maskv[None]              # (Bt, H*N, D)

    # content[b, n, h*N+m] = <q_h[b,n], k_h[b,m]> / sqrt(D)
    content = jnp.einsum('bnd,bmd->bnm', q, kb,
                         preferred_element_type=jnp.float32)         # (Bt, N, H*N)

    # Location MLP, lane-packed across heads: lane h*N+m uses head h's coefficients.
    coef = coef_ref[...]                                             # (16, H*N)

    def row(i):                                                      # (1, H*N) coeff row
        return coef[i:i + 1]

    xp = xp_ref[...]                                                 # (Bt, 3, N, N)
    xpc = [jnp.concatenate([xp[:, c]] * H, axis=-1) for c in range(3)]  # 3x (Bt, N, H*N)

    hid = []
    for o in range(3):                                               # Linear(3,3) + ReLU
        t = (xpc[0] * row(3 * o + 0) + xpc[1] * row(3 * o + 1)
             + xpc[2] * row(3 * o + 2) + row(9 + o))
        hid.append(jnp.maximum(t, 0.0))
    loc = hid[0] * row(12) + hid[1] * row(13) + hid[2] * row(14) + row(15)  # Linear(3,1)

    logits = content + loc                                           # (Bt, N, H*N)

    # Exact per-head-block softmax: per-block max (no global-max underflow) and
    # per-block sum via XLU reductions on static lane slices (no block-ones matmul).
    blocks = []
    for h in range(H):
        lh = logits[:, :, h * N:(h + 1) * N]                         # (Bt, N, N)
        mh = jnp.max(lh, axis=-1, keepdims=True)
        eh = jnp.exp(lh - mh)
        dh = jnp.sum(eh, axis=-1, keepdims=True)                     # >= 1, safe
        inv = pl.reciprocal(dh, approx=True)
        inv = inv * (2.0 - dh * inv)          # one Newton step -> full f32 accuracy
        blocks.append(eh * inv)
    a = jnp.concatenate(blocks, axis=-1)                             # (Bt, N, H*N)

    # A @ V with heads already routed to their output channel slots -> no concat.
    head_cat = jnp.einsum('bnm,bmd->bnd', a, vb,
                          preferred_element_type=jnp.float32)        # (Bt, N, D)

    o1 = (v + head_cat).reshape(Bt * N, D)
    o2 = o1 + jnp.maximum(
        jnp.dot(o1, wo_ref[...], preferred_element_type=jnp.float32) + bo_ref[...], 0.0)
    o_ref[...] = o2                                                  # (Bt*N, D) slab


def eqv_self_attention_block(x_lift, y_lift, x_pairs, params, *, num_heads,
                             batch_tile=None):
    """Pallas wrapper. x_lift is accepted for signature parity but unused."""
    del x_lift
    B, N, D = y_lift.shape
    H = num_heads
    assert D % H == 0
    ds = D // H
    HN = H * N
    f32 = jnp.float32
    inv_scale = 1.0 / math.sqrt(D)

    if batch_tile is None:
        batch_tile = _pick_batch_tile(B, N)
    Bt = batch_tile
    assert B % Bt == 0

    wq, bq, wk, bk, wv, bv, wo, bo, w1, b1, w2, b2 = params

    # Channel-first pair features: each of the 3 channels is a lane-dense (N, N) slab.
    xp_cf = jnp.transpose(x_pairs, (0, 3, 1, 2)).astype(f32)         # (B, 3, N, N)

    # Fused QKV weight in (in, out) layout; 1/sqrt(D) folded into the Q slice.
    wqkv = jnp.concatenate(
        [jnp.asarray(wq, f32).T * inv_scale,
         jnp.asarray(wk, f32).T,
         jnp.asarray(wv, f32).T], axis=1)                            # (D, 3D)
    bqkv = jnp.concatenate(
        [jnp.asarray(bq, f32) * inv_scale,
         jnp.asarray(bk, f32),
         jnp.asarray(bv, f32)]).reshape(1, 3 * D)
    wo_t = jnp.asarray(wo, f32).T                                    # (D, D)
    bo2 = jnp.asarray(bo, f32).reshape(1, D)

    # Per-lane coefficient rows for the lane-packed location MLP.
    # Rows 0..8: w1[h,o,c] at row o*3+c; 9..11: b1[h,o]; 12..14: w2[h,0,o]; 15: b2[h,0].
    coef = jnp.concatenate([
        jnp.asarray(w1, f32).transpose(1, 2, 0).reshape(9, H),
        jnp.asarray(b1, f32).T.reshape(3, H),
        jnp.asarray(w2, f32)[:, 0, :].T.reshape(3, H),
        jnp.asarray(b2, f32).reshape(H, 1).T,
    ], axis=0)                                                       # (16, H)
    coef = jnp.repeat(coef, N, axis=1)                               # (16, H*N)

    # Block-diagonal head mask (constant): packed key row h*N+m keeps head h channels.
    row_head = jnp.arange(HN) // N
    col_head = jnp.arange(D) // ds
    maskv = (row_head[:, None] == col_head[None, :]).astype(f32)     # (H*N, D)

    y_flat = y_lift.astype(f32).reshape(B * N, D)                    # packed row layout

    kernel = functools.partial(_eqv_attn_kernel, num_heads=H, dim_v=D,
                               seq_len=N, batch_tile=Bt)
    const2d = lambda shape: pl.BlockSpec(shape, lambda b: (0, 0))

    out_flat = pl.pallas_call(
        kernel,
        out_shape=jax.ShapeDtypeStruct((B * N, D), f32),
        grid=(B // Bt,),
        in_specs=[
            pl.BlockSpec((Bt * N, D), lambda b: (b, 0)),             # Y_lift (packed rows)
            pl.BlockSpec((Bt, 3, N, N), lambda b: (b, 0, 0, 0)),     # X_pairs (channel-first)
            const2d((D, 3 * D)), const2d((1, 3 * D)),                # fused QKV
            const2d((D, D)), const2d((1, D)),                        # fc_o
            const2d((16, HN)),                                       # loc-MLP per-lane coefs
            const2d((HN, D)),                                        # block-diag head mask
        ],
        out_specs=pl.BlockSpec((Bt * N, D), lambda b: (b, 0)),
        compiler_params=pltpu.CompilerParams(dimension_semantics=("parallel",)),
    )(y_flat, xp_cf, wqkv, bqkv, wo_t, bo2, coef, maskv)
    return out_flat.reshape(B, N, D)


# ----------------------------- pure-JAX reference ---------------------------

def reference_forward(y_lift, x_pairs, params, *, num_heads):
    wq, bq, wk, bk, wv, bv, wo, bo, w1, b1, w2, b2 = params
    B, N, D = y_lift.shape
    q = y_lift @ wq.T + bq
    k = y_lift @ wk.T + bk
    v = y_lift @ wv.T + bv
    Q_ = jnp.concatenate(jnp.split(q, num_heads, axis=2), axis=0)    # (H*B, N, ds)
    K_ = jnp.concatenate(jnp.split(k, num_heads, axis=2), axis=0)
    V_ = jnp.concatenate(jnp.split(v, num_heads, axis=2), axis=0)
    content = jnp.einsum('bnd,bmd->bnm', Q_, K_) / math.sqrt(D)
    locs = []
    for h in range(num_heads):
        hdn = jax.nn.relu(x_pairs @ w1[h].T + b1[h])                 # (B, N, N, 3)
        locs.append((hdn @ w2[h].T + b2[h])[..., 0])                 # (B, N, N)
    loc = jnp.concatenate(locs, axis=0)                              # (H*B, N, N)
    logits = content + loc
    A = jax.nn.softmax(logits, axis=2)
    O = v + jnp.concatenate(jnp.split(A @ V_, num_heads, axis=0), axis=2)
    O = O + jax.nn.relu(O @ wo.T + bo)
    return O


# --------------------------------- params ------------------------------------

def init_linear(key, fan_in, fan_out):
    k1, k2 = jax.random.split(key)
    bound = 1.0 / math.sqrt(fan_in)
    w = jax.random.uniform(k1, (fan_out, fan_in), jnp.float32, -bound, bound)
    b = jax.random.uniform(k2, (fan_out,), jnp.float32, -bound, bound)
    return w, b


def init_params(key, dim_in, dim_out, num_heads):
    keys = jax.random.split(key, 5 + num_heads)
    wq, bq = init_linear(keys[0], dim_in, dim_out)
    wk, bk = init_linear(keys[1], dim_in, dim_out)
    wv, bv = init_linear(keys[2], dim_in, dim_out)
    wo, bo = init_linear(keys[3], dim_out, dim_out)
    w1s, b1s, w2s, b2s = [], [], [], []
    for h in range(num_heads):
        ka, kb = jax.random.split(keys[4 + h])
        a_w, a_b = init_linear(ka, 3, 3)
        c_w, c_b = init_linear(kb, 3, 1)
        w1s.append(a_w); b1s.append(a_b); w2s.append(c_w); b2s.append(c_b)
    return (wq, bq, wk, bk, wv, bv, wo, bo,
            jnp.stack(w1s), jnp.stack(b1s), jnp.stack(w2s), jnp.stack(b2s))


# ----------------------------------- main -------------------------------------

if __name__ == "__main__":
    B, N, D, H = 2, 8, 32, 4   # dim_in = dim_out = 32, 4 heads, set size 8

    key = jax.random.PRNGKey(0)
    k_y, k_x, k_p, k_params = jax.random.split(key, 4)
    y_lift = jax.random.normal(k_y, (B, N, D), jnp.float32)
    x_lift = jax.random.normal(k_x, (B, N, D), jnp.float32)          # unused by forward
    x_pairs = jax.random.normal(k_p, (B, N, N, 3), jnp.float32)
    params = init_params(k_params, D, D, H)

    out = eqv_self_attention_block(x_lift, y_lift, x_pairs, params, num_heads=H)
    out = jax.block_until_ready(out)

    ref = reference_forward(y_lift, x_pairs, params, num_heads=H)
    assert out.shape == (B, N, D)
    assert jnp.allclose(out, ref, atol=1e-4, rtol=1e-4), (
        "mismatch vs reference: max abs err = %e" % float(jnp.max(jnp.abs(out - ref))))

    print("KERNEL_OK")
</pallas_src>

<mosaic_0001>
module attributes {stable_mosaic.version = 11 : i64} {
  func.func @_eqv_attn_kernel(%arg0: i32, %arg1: memref<16x32xf32, #tpu.memory_space<vmem>>, %arg2: memref<2x3x8x8xf32, #tpu.memory_space<vmem>>, %arg3: memref<32x96xf32, #tpu.memory_space<vmem>>, %arg4: memref<1x96xf32, #tpu.memory_space<vmem>>, %arg5: memref<32x32xf32, #tpu.memory_space<vmem>>, %arg6: memref<1x32xf32, #tpu.memory_space<vmem>>, %arg7: memref<16x32xf32, #tpu.memory_space<vmem>>, %arg8: memref<32x32xf32, #tpu.memory_space<vmem>>, %arg9: memref<16x32xf32, #tpu.memory_space<vmem>>) attributes {dimension_semantics = [#tpu.dimension_semantics<parallel>], iteration_bounds = array<i64: 1>, scalar_prefetch = 0 : i64, scratch_operands = 0 : i64, tpu.core_type = #tpu.core_type<tc>, window_params = [{transform_indices = @transform_0, window_bounds = array<i64: 16, 32>}, {transform_indices = @transform_1, window_bounds = array<i64: 2, 3, 8, 8>}, {pipeline_mode = #tpu.pipeline_mode<synchronous>, transform_indices = @transform_2, window_bounds = array<i64: 32, 96>}, {pipeline_mode = #tpu.pipeline_mode<synchronous>, transform_indices = @transform_3, window_bounds = array<i64: 1, 96>}, {pipeline_mode = #tpu.pipeline_mode<synchronous>, transform_indices = @transform_4, window_bounds = array<i64: 32, 32>}, {pipeline_mode = #tpu.pipeline_mode<synchronous>, transform_indices = @transform_5, window_bounds = array<i64: 1, 32>}, {pipeline_mode = #tpu.pipeline_mode<synchronous>, transform_indices = @transform_6, window_bounds = array<i64: 16, 32>}, {pipeline_mode = #tpu.pipeline_mode<synchronous>, transform_indices = @transform_7, window_bounds = array<i64: 32, 32>}, {transform_indices = @transform_8, window_bounds = array<i64: 16, 32>}]} {
    %c0 = arith.constant 0 : index
    %c0_0 = arith.constant 0 : index
    %0 = vector.load %arg1[%c0, %c0_0] : memref<16x32xf32, #tpu.memory_space<vmem>>, vector<16x32xf32>
    %c0_1 = arith.constant 0 : index
    %c0_2 = arith.constant 0 : index
    %1 = vector.load %arg3[%c0_1, %c0_2] : memref<32x96xf32, #tpu.memory_space<vmem>>, vector<32x96xf32>
    %cst = arith.constant dense<0.000000e+00> : vector<16x96xf32>
    %2 = tpu.matmul %0, %1, %cst {dimension_numbers = #tpu.dot_dimension_numbers<[1], [0], [0], [1], [0, 0, 1, 1], [], []>} : vector<16x32xf32>, vector<32x96xf32>, vector<16x96xf32> -> vector<16x96xf32>
    %c0_3 = arith.constant 0 : index
    %c0_4 = arith.constant 0 : index
    %3 = vector.load %arg4[%c0_3, %c0_4] : memref<1x96xf32, #tpu.memory_space<vmem>>, vector<1x96xf32>
    %4 = vector.broadcast %3 : vector<1x96xf32> to vector<16x96xf32>
    %5 = arith.addf %2, %4 : vector<16x96xf32>
    %6 = vector.extract_strided_slice %5 {offsets = [0, 0], sizes = [16, 32], strides = [1, 1]} : vector<16x96xf32> to vector<16x32xf32>
    %7 = vector.shape_cast %6 : vector<16x32xf32> to vector<2x8x32xf32>
    %8 = vector.extract_strided_slice %5 {offsets = [0, 32], sizes = [16, 32], strides = [1, 1]} : vector<16x96xf32> to vector<16x32xf32>
    %9 = vector.shape_cast %8 : vector<16x32xf32> to vector<2x8x32xf32>
    %10 = vector.extract_strided_slice %5 {offsets = [0, 64], sizes = [16, 32], strides = [1, 1]} : vector<16x96xf32> to vector<16x32xf32>
    %11 = vector.shape_cast %10 : vector<16x32xf32> to vector<2x8x32xf32>
    %c0_5 = arith.constant 0 : index
    %c0_6 = arith.constant 0 : index
    %12 = vector.load %arg8[%c0_5, %c0_6] : memref<32x32xf32, #tpu.memory_space<vmem>>, vector<32x32xf32>
    %13 = tpu.concatenate %9, %9, %9, %9 in 1 : vector<2x8x32xf32>, vector<2x8x32xf32>, vector<2x8x32xf32>, vector<2x8x32xf32> -> vector<2x32x32xf32>
    %14 = vector.shape_cast %12 : vector<32x32xf32> to vector<1x32x32xf32>
    %15 = vector.broadcast %14 : vector<1x32x32xf32> to vector<2x32x32xf32>
    %16 = arith.mulf %13, %15 : vector<2x32x32xf32>
    %17 = tpu.concatenate %11, %11, %11, %11 in 1 : vector<2x8x32xf32>, vector<2x8x32xf32>, vector<2x8x32xf32>, vector<2x8x32xf32> -> vector<2x32x32xf32>
    %18 = vector.shape_cast %12 : vector<32x32xf32> to vector<1x32x32xf32>
    %19 = vector.broadcast %18 : vector<1x32x32xf32> to vector<2x32x32xf32>
    %20 = arith.mulf %17, %19 : vector<2x32x32xf32>
    "tpu.trace_start"() <{level = 10 : i32, message = "bnd,bmd->bnm"}> : () -> ()
    %cst_7 = arith.constant dense<0.000000e+00> : vector<2x8x32xf32>
    %21 = tpu.matmul %7, %16, %cst_7 {dimension_numbers = #tpu.dot_dimension_numbers<[2], [2], [1], [1], [0, 0, 0, 1, 1, 1], [0], [0]>} : vector<2x8x32xf32>, vector<2x32x32xf32>, vector<2x8x32xf32> -> vector<2x8x32xf32>
    "tpu.trace_stop"() : () -> ()
    %c0_8 = arith.constant 0 : index
    %c0_9 = arith.constant 0 : index
    %22 = vector.load %arg7[%c0_8, %c0_9] : memref<16x32xf32, #tpu.memory_space<vmem>>, vector<16x32xf32>
    %c0_10 = arith.constant 0 : index
    %c0_11 = arith.constant 0 : index
    %c0_12 = arith.constant 0 : index
    %c0_13 = arith.constant 0 : index
    %23 = vector.load %arg2[%c0_10, %c0_11, %c0_12, %c0_13] : memref<2x3x8x8xf32, #tpu.memory_space<vmem>>, vector<2x3x8x8xf32>
    %24 = vector.extract_strided_slice %23 {offsets = [0, 0, 0, 0], sizes = [2, 1, 8, 8], strides = [1, 1, 1, 1]} : vector<2x3x8x8xf32> to vector<2x1x8x8xf32>
    %25 = vector.shape_cast %24 : vector<2x1x8x8xf32> to vector<2x8x8xf32>
    %26 = tpu.concatenate %25, %25, %25, %25 in 2 : vector<2x8x8xf32>, vector<2x8x8xf32>, vector<2x8x8xf32>, vector<2x8x8xf32> -> vector<2x8x32xf32>
    %27 = vector.extract_strided_slice %23 {offsets = [0, 1, 0, 0], sizes = [2, 1, 8, 8], strides = [1, 1, 1, 1]} : vector<2x3x8x8xf32> to vector<2x1x8x8xf32>
    %28 = vector.shape_cast %27 : vector<2x1x8x8xf32> to vector<2x8x8xf32>
    %29 = tpu.concatenate %28, %28, %28, %28 in 2 : vector<2x8x8xf32>, vector<2x8x8xf32>, vector<2x8x8xf32>, vector<2x8x8xf32> -> vector<2x8x32xf32>
    %30 = vector.extract_strided_slice %23 {offsets = [0, 2, 0, 0], sizes = [2, 1, 8, 8], strides = [1, 1, 1, 1]} : vector<2x3x8x8xf32> to vector<2x1x8x8xf32>
    %31 = vector.shape_cast %30 : vector<2x1x8x8xf32> to vector<2x8x8xf32>
    %32 = tpu.concatenate %31, %31, %31, %31 in 2 : vector<2x8x8xf32>, vector<2x8x8xf32>, vector<2x8x8xf32>, vector<2x8x8xf32> -> vector<2x8x32xf32>
    %33 = vector.extract_strided_slice %22 {offsets = [0, 0], sizes = [1, 32], strides = [1, 1]} : vector<16x32xf32> to vector<1x32xf32>
    %34 = vector.shape_cast %33 : vector<1x32xf32> to vector<1x1x32xf32>
    %35 = vector.broadcast %34 : vector<1x1x32xf32> to vector<2x8x32xf32>
    %36 = arith.mulf %26, %35 : vector<2x8x32xf32>
    %37 = vector.extract_strided_slice %22 {offsets = [1, 0], sizes = [1, 32], strides = [1, 1]} : vector<16x32xf32> to vector<1x32xf32>
    %38 = vector.shape_cast %37 : vector<1x32xf32> to vector<1x1x32xf32>
    %39 = vector.broadcast %38 : vector<1x1x32xf32> to vector<2x8x32xf32>
    %40 = arith.mulf %29, %39 : vector<2x8x32xf32>
    %41 = arith.addf %36, %40 : vector<2x8x32xf32>
    %42 = vector.extract_strided_slice %22 {offsets = [2, 0], sizes = [1, 32], strides = [1, 1]} : vector<16x32xf32> to vector<1x32xf32>
    %43 = vector.shape_cast %42 : vector<1x32xf32> to vector<1x1x32xf32>
    %44 = vector.broadcast %43 : vector<1x1x32xf32> to vector<2x8x32xf32>
    %45 = arith.mulf %32, %44 : vector<2x8x32xf32>
    %46 = arith.addf %41, %45 : vector<2x8x32xf32>
    %47 = vector.extract_strided_slice %22 {offsets = [9, 0], sizes = [1, 32], strides = [1, 1]} : vector<16x32xf32> to vector<1x32xf32>
    %48 = vector.shape_cast %47 : vector<1x32xf32> to vector<1x1x32xf32>
    %49 = vector.broadcast %48 : vector<1x1x32xf32> to vector<2x8x32xf32>
    %50 = arith.addf %46, %49 : vector<2x8x32xf32>
    %cst_14 = arith.constant 0.000000e+00 : f32
    %51 = vector.broadcast %cst_14 : f32 to vector<2x8x32xf32>
    %52 = arith.maximumf %50, %51 : vector<2x8x32xf32>
    %53 = vector.extract_strided_slice %22 {offsets = [3, 0], sizes = [1, 32], strides = [1, 1]} : vector<16x32xf32> to vector<1x32xf32>
    %54 = vector.shape_cast %53 : vector<1x32xf32> to vector<1x1x32xf32>
    %55 = vector.broadcast %54 : vector<1x1x32xf32> to vector<2x8x32xf32>
    %56 = arith.mulf %26, %55 : vector<2x8x32xf32>
    %57 = vector.extract_strided_slice %22 {offsets = [4, 0], sizes = [1, 32], strides = [1, 1]} : vector<16x32xf32> to vector<1x32xf32>
    %58 = vector.shape_cast %57 : vector<1x32xf32> to vector<1x1x32xf32>
    %59 = vector.broadcast %58 : vector<1x1x32xf32> to vector<2x8x32xf32>
    %60 = arith.mulf %29, %59 : vector<2x8x32xf32>
    %61 = arith.addf %56, %60 : vector<2x8x32xf32>
    %62 = vector.extract_strided_slice %22 {offsets = [5, 0], sizes = [1, 32], strides = [1, 1]} : vector<16x32xf32> to vector<1x32xf32>
    %63 = vector.shape_cast %62 : vector<1x32xf32> to vector<1x1x32xf32>
    %64 = vector.broadcast %63 : vector<1x1x32xf32> to vector<2x8x32xf32>
    %65 = arith.mulf %32, %64 : vector<2x8x32xf32>
    %66 = arith.addf %61, %65 : vector<2x8x32xf32>
    %67 = vector.extract_strided_slice %22 {offsets = [10, 0], sizes = [1, 32], strides = [1, 1]} : vector<16x32xf32> to vector<1x32xf32>
    %68 = vector.shape_cast %67 : vector<1x32xf32> to vector<1x1x32xf32>
    %69 = vector.broadcast %68 : vector<1x1x32xf32> to vector<2x8x32xf32>
    %70 = arith.addf %66, %69 : vector<2x8x32xf32>
    %cst_15 = arith.constant 0.000000e+00 : f32
    %71 = vector.broadcast %cst_15 : f32 to vector<2x8x32xf32>
    %72 = arith.maximumf %70, %71 : vector<2x8x32xf32>
    %73 = vector.extract_strided_slice %22 {offsets = [6, 0], sizes = [1, 32], strides = [1, 1]} : vector<16x32xf32> to vector<1x32xf32>
    %74 = vector.shape_cast %73 : vector<1x32xf32> to vector<1x1x32xf32>
    %75 = vector.broadcast %74 : vector<1x1x32xf32> to vector<2x8x32xf32>
    %76 = arith.mulf %26, %75 : vector<2x8x32xf32>
    %77 = vector.extract_strided_slice %22 {offsets = [7, 0], sizes = [1, 32], strides = [1, 1]} : vector<16x32xf32> to vector<1x32xf32>
    %78 = vector.shape_cast %77 : vector<1x32xf32> to vector<1x1x32xf32>
    %79 = vector.broadcast %78 : vector<1x1x32xf32> to vector<2x8x32xf32>
    %80 = arith.mulf %29, %79 : vector<2x8x32xf32>
    %81 = arith.addf %76, %80 : vector<2x8x32xf32>
    %82 = vector.extract_strided_slice %22 {offsets = [8, 0], sizes = [1, 32], strides = [1, 1]} : vector<16x32xf32> to vector<1x32xf32>
    %83 = vector.shape_cast %82 : vector<1x32xf32> to vector<1x1x32xf32>
    %84 = vector.broadcast %83 : vector<1x1x32xf32> to vector<2x8x32xf32>
    %85 = arith.mulf %32, %84 : vector<2x8x32xf32>
    %86 = arith.addf %81, %85 : vector<2x8x32xf32>
    %87 = vector.extract_strided_slice %22 {offsets = [11, 0], sizes = [1, 32], strides = [1, 1]} : vector<16x32xf32> to vector<1x32xf32>
    %88 = vector.shape_cast %87 : vector<1x32xf32> to vector<1x1x32xf32>
    %89 = vector.broadcast %88 : vector<1x1x32xf32> to vector<2x8x32xf32>
    %90 = arith.addf %86, %89 : vector<2x8x32xf32>
    %cst_16 = arith.constant 0.000000e+00 : f32
    %91 = vector.broadcast %cst_16 : f32 to vector<2x8x32xf32>
    %92 = arith.maximumf %90, %91 : vector<2x8x32xf32>
    %93 = vector.extract_strided_slice %22 {offsets = [12, 0], sizes = [1, 32], strides = [1, 1]} : vector<16x32xf32> to vector<1x32xf32>
    %94 = vector.shape_cast %93 : vector<1x32xf32> to vector<1x1x32xf32>
    %95 = vector.broadcast %94 : vector<1x1x32xf32> to vector<2x8x32xf32>
    %96 = arith.mulf %52, %95 : vector<2x8x32xf32>
    %97 = vector.extract_strided_slice %22 {offsets = [13, 0], sizes = [1, 32], strides = [1, 1]} : vector<16x32xf32> to vector<1x32xf32>
    %98 = vector.shape_cast %97 : vector<1x32xf32> to vector<1x1x32xf32>
    %99 = vector.broadcast %98 : vector<1x1x32xf32> to vector<2x8x32xf32>
    %100 = arith.mulf %72, %99 : vector<2x8x32xf32>
    %101 = arith.addf %96, %100 : vector<2x8x32xf32>
    %102 = vector.extract_strided_slice %22 {offsets = [14, 0], sizes = [1, 32], strides = [1, 1]} : vector<16x32xf32> to vector<1x32xf32>
    %103 = vector.shape_cast %102 : vector<1x32xf32> to vector<1x1x32xf32>
    %104 = vector.broadcast %103 : vector<1x1x32xf32> to vector<2x8x32xf32>
    %105 = arith.mulf %92, %104 : vector<2x8x32xf32>
    %106 = arith.addf %101, %105 : vector<2x8x32xf32>
    %107 = vector.extract_strided_slice %22 {offsets = [15, 0], sizes = [1, 32], strides = [1, 1]} : vector<16x32xf32> to vector<1x32xf32>
    %108 = vector.shape_cast %107 : vector<1x32xf32> to vector<1x1x32xf32>
    %109 = vector.broadcast %108 : vector<1x1x32xf32> to vector<2x8x32xf32>
    %110 = arith.addf %106, %109 : vector<2x8x32xf32>
    %111 = arith.addf %21, %110 : vector<2x8x32xf32>
    %112 = vector.extract_strided_slice %111 {offsets = [0, 0, 0], sizes = [2, 8, 8], strides = [1, 1, 1]} : vector<2x8x32xf32> to vector<2x8x8xf32>
    %cst_17 = arith.constant dense<0xFF800000> : vector<2x8xf32>
    %113 = vector.multi_reduction <maximumf>, %112, %cst_17 [2] : vector<2x8x8xf32> to vector<2x8xf32>
    %114 = vector.shape_cast %113 : vector<2x8xf32> to vector<2x8x1xf32>
    %115 = vector.broadcast %114 : vector<2x8x1xf32> to vector<2x8x8xf32>
    %116 = arith.subf %112, %115 : vector<2x8x8xf32>
    %117 = math.exp %116 : vector<2x8x8xf32>
    %cst_18 = arith.constant dense<0.000000e+00> : vector<2x8xf32>
    %118 = vector.multi_reduction <add>, %117, %cst_18 [2] : vector<2x8x8xf32> to vector<2x8xf32>
    %119 = vector.shape_cast %118 : vector<2x8xf32> to vector<2x8x1xf32>
    %120 = tpu.reciprocal %119 {approx = true} : vector<2x8x1xf32> -> vector<2x8x1xf32>
    %121 = arith.mulf %119, %120 : vector<2x8x1xf32>
    %cst_19 = arith.constant 2.000000e+00 : f32
    %122 = vector.broadcast %cst_19 : f32 to vector<2x8x1xf32>
    %123 = arith.subf %122, %121 : vector<2x8x1xf32>
    %124 = arith.mulf %120, %123 : vector<2x8x1xf32>
    %125 = vector.broadcast %124 : vector<2x8x1xf32> to vector<2x8x8xf32>
    %126 = arith.mulf %117, %125 : vector<2x8x8xf32>
    %127 = vector.extract_strided_slice %111 {offsets = [0, 0, 8], sizes = [2, 8, 8], strides = [1, 1, 1]} : vector<2x8x32xf32> to vector<2x8x8xf32>
    %cst_20 = arith.constant dense<0xFF800000> : vector<2x8xf32>
    %128 = vector.multi_reduction <maximumf>, %127, %cst_20 [2] : vector<2x8x8xf32> to vector<2x8xf32>
    %129 = vector.shape_cast %128 : vector<2x8xf32> to vector<2x8x1xf32>
    %130 = vector.broadcast %129 : vector<2x8x1xf32> to vector<2x8x8xf32>
    %131 = arith.subf %127, %130 : vector<2x8x8xf32>
    %132 = math.exp %131 : vector<2x8x8xf32>
    %cst_21 = arith.constant dense<0.000000e+00> : vector<2x8xf32>
    %133 = vector.multi_reduction <add>, %132, %cst_21 [2] : vector<2x8x8xf32> to vector<2x8xf32>
    %134 = vector.shape_cast %133 : vector<2x8xf32> to vector<2x8x1xf32>
    %135 = tpu.reciprocal %134 {approx = true} : vector<2x8x1xf32> -> vector<2x8x1xf32>
    %136 = arith.mulf %134, %135 : vector<2x8x1xf32>
    %cst_22 = arith.constant 2.000000e+00 : f32
    %137 = vector.broadcast %cst_22 : f32 to vector<2x8x1xf32>
    %138 = arith.subf %137, %136 : vector<2x8x1xf32>
    %139 = arith.mulf %135, %138 : vector<2x8x1xf32>
    %140 = vector.broadcast %139 : vector<2x8x1xf32> to vector<2x8x8xf32>
    %141 = arith.mulf %132, %140 : vector<2x8x8xf32>
    %142 = vector.extract_strided_slice %111 {offsets = [0, 0, 16], sizes = [2, 8, 8], strides = [1, 1, 1]} : vector<2x8x32xf32> to vector<2x8x8xf32>
    %cst_23 = arith.constant dense<0xFF800000> : vector<2x8xf32>
    %143 = vector.multi_reduction <maximumf>, %142, %cst_23 [2] : vector<2x8x8xf32> to vector<2x8xf32>
    %144 = vector.shape_cast %143 : vector<2x8xf32> to vector<2x8x1xf32>
    %145 = vector.broadcast %144 : vector<2x8x1xf32> to vector<2x8x8xf32>
    %146 = arith.subf %142, %145 : vector<2x8x8xf32>
    %147 = math.exp %146 : vector<2x8x8xf32>
    %cst_24 = arith.constant dense<0.000000e+00> : vector<2x8xf32>
    %148 = vector.multi_reduction <add>, %147, %cst_24 [2] : vector<2x8x8xf32> to vector<2x8xf32>
    %149 = vector.shape_cast %148 : vector<2x8xf32> to vector<2x8x1xf32>
    %150 = tpu.reciprocal %149 {approx = true} : vector<2x8x1xf32> -> vector<2x8x1xf32>
    %151 = arith.mulf %149, %150 : vector<2x8x1xf32>
    %cst_25 = arith.constant 2.000000e+00 : f32
    %152 = vector.broadcast %cst_25 : f32 to vector<2x8x1xf32>
    %153 = arith.subf %152, %151 : vector<2x8x1xf32>
    %154 = arith.mulf %150, %153 : vector<2x8x1xf32>
    %155 = vector.broadcast %154 : vector<2x8x1xf32> to vector<2x8x8xf32>
    %156 = arith.mulf %147, %155 : vector<2x8x8xf32>
    %157 = vector.extract_strided_slice %111 {offsets = [0, 0, 24], sizes = [2, 8, 8], strides = [1, 1, 1]} : vector<2x8x32xf32> to vector<2x8x8xf32>
    %cst_26 = arith.constant dense<0xFF800000> : vector<2x8xf32>
    %158 = vector.multi_reduction <maximumf>, %157, %cst_26 [2] : vector<2x8x8xf32> to vector<2x8xf32>
    %159 = vector.shape_cast %158 : vector<2x8xf32> to vector<2x8x1xf32>
    %160 = vector.broadcast %159 : vector<2x8x1xf32> to vector<2x8x8xf32>
    %161 = arith.subf %157, %160 : vector<2x8x8xf32>
    %162 = math.exp %161 : vector<2x8x8xf32>
    %cst_27 = arith.constant dense<0.000000e+00> : vector<2x8xf32>
    %163 = vector.multi_reduction <add>, %162, %cst_27 [2] : vector<2x8x8xf32> to vector<2x8xf32>
    %164 = vector.shape_cast %163 : vector<2x8xf32> to vector<2x8x1xf32>
    %165 = tpu.reciprocal %164 {approx = true} : vector<2x8x1xf32> -> vector<2x8x1xf32>
    %166 = arith.mulf %164, %165 : vector<2x8x1xf32>
    %cst_28 = arith.constant 2.000000e+00 : f32
    %167 = vector.broadcast %cst_28 : f32 to vector<2x8x1xf32>
    %168 = arith.subf %167, %166 : vector<2x8x1xf32>
    %169 = arith.mulf %165, %168 : vector<2x8x1xf32>
    %170 = vector.broadcast %169 : vector<2x8x1xf32> to vector<2x8x8xf32>
    %171 = arith.mulf %162, %170 : vector<2x8x8xf32>
    %172 = tpu.concatenate %126, %141, %156, %171 in 2 : vector<2x8x8xf32>, vector<2x8x8xf32>, vector<2x8x8xf32>, vector<2x8x8xf32> -> vector<2x8x32xf32>
    "tpu.trace_start"() <{level = 10 : i32, message = "bnm,bmd->bnd"}> : () -> ()
    %cst_29 = arith.constant dense<0.000000e+00> : vector<2x8x32xf32>
    %173 = tpu.matmul %172, %20, %cst_29 {dimension_numbers = #tpu.dot_dimension_numbers<[2], [1], [1], [2], [0, 0, 0, 1, 1, 2], [0], [0]>} : vector<2x8x32xf32>, vector<2x32x32xf32>, vector<2x8x32xf32> -> vector<2x8x32xf32>
    "tpu.trace_stop"() : () -> ()
    %174 = arith.addf %11, %173 : vector<2x8x32xf32>
    %175 = vector.shape_cast %174 : vector<2x8x32xf32> to vector<16x32xf32>
    %c0_30 = arith.constant 0 : index
    %c0_31 = arith.constant 0 : index
    %176 = vector.load %arg5[%c0_30, %c0_31] : memref<32x32xf32, #tpu.memory_space<vmem>>, vector<32x32xf32>
    %cst_32 = arith.constant dense<0.000000e+00> : vector<16x32xf32>
    %177 = tpu.matmul %175, %176, %cst_32 {dimension_numbers = #tpu.dot_dimension_numbers<[1], [0], [0], [1], [0, 0, 1, 1], [], []>} : vector<16x32xf32>, vector<32x32xf32>, vector<16x32xf32> -> vector<16x32xf32>
    %c0_33 = arith.constant 0 : index
    %c0_34 = arith.constant 0 : index
    %178 = vector.load %arg6[%c0_33, %c0_34] : memref<1x32xf32, #tpu.memory_space<vmem>>, vector<1x32xf32>
    %179 = vector.broadcast %178 : vector<1x32xf32> to vector<16x32xf32>
    %180 = arith.addf %177, %179 : vector<16x32xf32>
    %cst_35 = arith.constant 0.000000e+00 : f32
    %181 = vector.broadcast %cst_35 : f32 to vector<16x32xf32>
    %182 = arith.maximumf %180, %181 : vector<16x32xf32>
    %183 = arith.addf %175, %182 : vector<16x32xf32>
    %c0_36 = arith.constant 0 : index
    %c0_37 = arith.constant 0 : index
    %184 = vector.load %arg9[%c0_36, %c0_37] : memref<16x32xf32, #tpu.memory_space<vmem>>, vector<16x32xf32>
    tpu.vector_store %arg9[%c0_36, %c0_37], %183 {strides = array<i32>} : memref<16x32xf32, #tpu.memory_space<vmem>>, vector<16x32xf32>,
    return
  }
  func.func @transform_0(%arg0: i32) -> (i32, i32) {
    %c0_i32 = arith.constant 0 : i32
    %c0_i32_0 = arith.constant 0 : i32
    return %arg0, %c0_i32 : i32, i32
  }
  func.func @transform_1(%arg0: i32) -> (i32, i32, i32, i32) {
    %c0_i32 = arith.constant 0 : i32
    %c0_i32_0 = arith.constant 0 : i32
    %c0_i32_1 = arith.constant 0 : i32
    %c0_i32_2 = arith.constant 0 : i32
    return %arg0, %c0_i32, %c0_i32_0, %c0_i32_1 : i32, i32, i32, i32
  }
  func.func @transform_2(%arg0: i32) -> (i32, i32) {
    %c0_i32 = arith.constant 0 : i32
    %c0_i32_0 = arith.constant 0 : i32
    %c0_i32_1 = arith.constant 0 : i32
    return %c0_i32, %c0_i32_0 : i32, i32
  }
  func.func @transform_3(%arg0: i32) -> (i32, i32) {
    %c0_i32 = arith.constant 0 : i32
    %c0_i32_0 = arith.constant 0 : i32
    %c0_i32_1 = arith.constant 0 : i32
    return %c0_i32, %c0_i32_0 : i32, i32
  }
  func.func @transform_4(%arg0: i32) -> (i32, i32) {
    %c0_i32 = arith.constant 0 : i32
    %c0_i32_0 = arith.constant 0 : i32
    %c0_i32_1 = arith.constant 0 : i32
    return %c0_i32, %c0_i32_0 : i32, i32
  }
  func.func @transform_5(%arg0: i32) -> (i32, i32) {
    %c0_i32 = arith.constant 0 : i32
    %c0_i32_0 = arith.constant 0 : i32
    %c0_i32_1 = arith.constant 0 : i32
    return %c0_i32, %c0_i32_0 : i32, i32
  }
  func.func @transform_6(%arg0: i32) -> (i32, i32) {
    %c0_i32 = arith.constant 0 : i32
    %c0_i32_0 = arith.constant 0 : i32
    %c0_i32_1 = arith.constant 0 : i32
    return %c0_i32, %c0_i32_0 : i32, i32
  }
  func.func @transform_7(%arg0: i32) -> (i32, i32) {
    %c0_i32 = arith.constant 0 : i32
    %c0_i32_0 = arith.constant 0 : i32
    %c0_i32_1 = arith.constant 0 : i32
    return %c0_i32, %c0_i32_0 : i32, i32
  }
  func.func @transform_8(%arg0: i32) -> (i32, i32) {
    %c0_i32 = arith.constant 0 : i32
    %c0_i32_0 = arith.constant 0 : i32
    return %arg0, %c0_i32 : i32, i32
  }
}

</mosaic_0001>

<llo_original>
// kernel: tpu_custom_call.1
$region0: #{tpu_custom_call.1}
  #allocation0 [shape = 'u32[]', space=smem, size = 0x4, offset = 0x4, fixed_abs, tag = 'smem constant byte address 0x4 - core index']
  #allocation1 [shape = 'u32[144,128]{1,0:T(1,128)}', space=vmem, size = 0x12000, scoped, tag = 'internal scratch']
  %s0 = inlined_call_operand.hbm [shape: f32[16,32], index: 0, kind: input, shape index: {}]
  %s1 = inlined_call_operand.hbm [shape: f32[2,3,8,8], index: 1, kind: input, shape index: {}]
  %s2 = inlined_call_operand.hbm [shape: f32[32,96], index: 2, kind: input, shape index: {}]
  %s3 = inlined_call_operand.vmem [shape: f32[1,96], index: 3, kind: input, shape index: {}]
  %s4 = inlined_call_operand.hbm [shape: f32[32,32], index: 4, kind: input, shape index: {}]
  %s5 = inlined_call_operand.vmem [shape: f32[1,32], index: 5, kind: input, shape index: {}]
  %s6 = inlined_call_operand.vmem [shape: f32[16,32], index: 6, kind: input, shape index: {}]
  %s7 = inlined_call_operand.hbm [shape: f32[32,32], index: 7, kind: input, shape index: {}]
  %s8 = inlined_call_operand.hbm [shape: f32[16,32], index: 8, kind: output, shape index: {}]
  %s9 = sld [smem:[#allocation0]]
  $region62: #{tpu_custom_call.1} parent=0
    _
  %s11 = ssub.s32 1, %s9
  %s12 = scalar_select 0, %s11, %s9
  $region1: #{tpu_custom_call.1} parent=0
    #allocation2 [shape = 'u8[8192]{0}', space=vmem, size = 0x2000, scoped, tag = 'input window, operand 0, single buffered']
    #allocation3 [shape = 's32[1]{0}', space=sflag, size = 0x4, scoped, tag = 'scoped memory for tpu_custom_call.1']
    #allocation4 [shape = 's32[1]{0}', space=sflag, size = 0x4, scoped, tag = 'scoped memory for tpu_custom_call.1']
    #allocation5 [shape = 'u8[24576]{0}', space=vmem, size = 0x6000, scoped, tag = 'input window, operand 1, single buffered']
    #allocation6 [shape = 's32[1]{0}', space=sflag, size = 0x4, scoped, tag = 'scoped memory for tpu_custom_call.1']
    #allocation7 [shape = 'u8[16384]{0}', space=vmem, size = 0x4000, scoped, tag = 'input window, operand 2, single buffered']
    #allocation8 [shape = 'u8[16384]{0}', space=vmem, size = 0x4000, scoped, tag = 'input window, operand 4, single buffered']
    #allocation9 [shape = 's32[1]{0}', space=sflag, size = 0x4, scoped, tag = 'scoped memory for tpu_custom_call.1']
    #allocation10 [shape = 'u8[16384]{0}', space=vmem, size = 0x4000, scoped, tag = 'input window, operand 7, single buffered']
    #allocation11 [shape = 'u8[8192]{0}', space=vmem, size = 0x2000, scoped, tag = 'output window, operand 0, single buffered']
    %13 = vsyncpa [#allocation3], 0
    %14 = vsyncpa [#allocation6], 0
    %15 = vsyncpa [#allocation9], 0
    %16 = vsyncpa [#allocation4], 0
    // Predicated region
    $region2: #{tpu_custom_call.1} parent=1 // pred_check
      _
    $region3: #{tpu_custom_call.1} parent=1 // pred_check_branch
      %18 = sbr.rel (0) target = $region5
    $region4: #{tpu_custom_call.1} parent=1 // pred_region
      %s20 = ssub.s32 256, 256
      %21 = vsyncadd [#allocation3], %s20
      %s22 = sshll.u32 [#allocation2], 4
      %s23 = int_to_ptr.vmem [resolvable:$true] %s22
      %28 = dma.hbm_to_vmem [thread:$0]  %s0, 256, %s23, [#allocation3], 128, 128, 8
    $region5: #{tpu_custom_call.1} parent=1 // pred_fallthru
      _
    // Predicated region
    $region6: #{tpu_custom_call.1} parent=1 // pred_check
      _
    $region7: #{tpu_custom_call.1} parent=1 // pred_check_branch
      %30 = sbr.rel (0) target = $region9
    $region8: #{tpu_custom_call.1} parent=1 // pred_region
      %s32 = ssub.s32 768, 768
      %33 = vsyncadd [#allocation6], %s32
      %s34 = sshll.u32 [#allocation5], 4
      %s35 = int_to_ptr.vmem [resolvable:$true] %s34
      %40 = dma.hbm_to_vmem [thread:$0]  %s1, 768, %s35, [#allocation6], 128, 128, 8
    $region9: #{tpu_custom_call.1} parent=1 // pred_fallthru
      _
    // Predicated region
    $region10: #{tpu_custom_call.1} parent=1 // pred_check
      _
    $region11: #{tpu_custom_call.1} parent=1 // pred_check_branch
      %42 = sbr.rel (0) target = $region13
    $region12: #{tpu_custom_call.1} parent=1 // pred_region
      %s44 = ssub.s32 512, 512
      %45 = vsyncadd [#allocation6], %s44
      %s46 = sshll.u32 [#allocation7], 4
      %s47 = int_to_ptr.vmem [resolvable:$true] %s46
      %52 = dma.hbm_to_vmem [thread:$0]  %s2, 512, %s47, [#allocation6], 128, 128, 8
    $region13: #{tpu_custom_call.1} parent=1 // pred_fallthru
      _
    // Predicated region
    $region14: #{tpu_custom_call.1} parent=1 // pred_check
      _
    $region15: #{tpu_custom_call.1} parent=1 // pred_check_branch
      %54 = sbr.rel (0) target = $region17
    $region16: #{tpu_custom_call.1} parent=1 // pred_region
      _
    $region17: #{tpu_custom_call.1} parent=1 // pred_fallthru
      _
    // Predicated region
    $region18: #{tpu_custom_call.1} parent=1 // pred_check
      _
    $region19: #{tpu_custom_call.1} parent=1 // pred_check_branch
      %56 = sbr.rel (0) target = $region21
    $region20: #{tpu_custom_call.1} parent=1 // pred_region
      %s58 = ssub.s32 512, 512
      %59 = vsyncadd [#allocation9], %s58
      %s60 = sshll.u32 [#allocation8], 4
      %s61 = int_to_ptr.vmem [resolvable:$true] %s60
      %66 = dma.hbm_to_vmem [thread:$0]  %s4, 512, %s61, [#allocation9], 128, 128, 8
    $region21: #{tpu_custom_call.1} parent=1 // pred_fallthru
      _
    // Predicated region
    $region22: #{tpu_custom_call.1} parent=1 // pred_check
      _
    $region23: #{tpu_custom_call.1} parent=1 // pred_check_branch
      %68 = sbr.rel (0) target = $region25
    $region24: #{tpu_custom_call.1} parent=1 // pred_region
      _
    $region25: #{tpu_custom_call.1} parent=1 // pred_fallthru
      _
    // Predicated region
    $region26: #{tpu_custom_call.1} parent=1 // pred_check
      _
    $region27: #{tpu_custom_call.1} parent=1 // pred_check_branch
      %70 = sbr.rel (0) target = $region29
    $region28: #{tpu_custom_call.1} parent=1 // pred_region
      _
    $region29: #{tpu_custom_call.1} parent=1 // pred_fallthru
      _
    // Predicated region
    $region30: #{tpu_custom_call.1} parent=1 // pred_check
      _
    $region31: #{tpu_custom_call.1} parent=1 // pred_check_branch
      %72 = sbr.rel (0) target = $region33
    $region32: #{tpu_custom_call.1} parent=1 // pred_region
      %s74 = ssub.s32 512, 512
      %75 = vsyncadd [#allocation9], %s74
      %s76 = sshll.u32 [#allocation10], 4
      %s77 = int_to_ptr.vmem [resolvable:$true] %s76
      %82 = dma.hbm_to_vmem [thread:$0]  %s7, 512, %s77, [#allocation9], 128, 128, 8
    $region33: #{tpu_custom_call.1} parent=1 // pred_fallthru
      _
    // Predicated region
    $region34: #{tpu_custom_call.1} parent=1 // pred_check
      _
    $region35: #{tpu_custom_call.1} parent=1 // pred_check_branch
      %84 = sbr.rel (0) target = $region37
    $region36: #{tpu_custom_call.1} parent=1 // pred_region
      %85 = dma.done [#allocation3], 256
    $region37: #{tpu_custom_call.1} parent=1 // pred_fallthru
      _
    // Predicated region
    $region38: #{tpu_custom_call.1} parent=1 // pred_check
      _
    $region39: #{tpu_custom_call.1} parent=1 // pred_check_branch
      %87 = sbr.rel (0) target = $region41
    $region40: #{tpu_custom_call.1} parent=1 // pred_region
      %88 = dma.done [#allocation6], 768
    $region41: #{tpu_custom_call.1} parent=1 // pred_fallthru
      _
    // Predicated region
    $region42: #{tpu_custom_call.1} parent=1 // pred_check
      _
    $region43: #{tpu_custom_call.1} parent=1 // pred_check_branch
      %90 = sbr.rel (0) target = $region45
    $region44: #{tpu_custom_call.1} parent=1 // pred_region
      %91 = dma.done [#allocation6], 512
    $region45: #{tpu_custom_call.1} parent=1 // pred_fallthru
      _
    // Predicated region
    $region46: #{tpu_custom_call.1} parent=1 // pred_check
      _
    $region47: #{tpu_custom_call.1} parent=1 // pred_check_branch
      %93 = sbr.rel (0) target = $region49
    $region48: #{tpu_custom_call.1} parent=1 // pred_region
      %94 = dma.done [#allocation9], 512
    $region49: #{tpu_custom_call.1} parent=1 // pred_fallthru
      _
    // Predicated region
    $region50: #{tpu_custom_call.1} parent=1 // pred_check
      _
    $region51: #{tpu_custom_call.1} parent=1 // pred_check_branch
      %96 = sbr.rel (0) target = $region53
    $region52: #{tpu_custom_call.1} parent=1 // pred_region
      %97 = dma.done [#allocation9], 512
    $region53: #{tpu_custom_call.1} parent=1 // pred_fallthru
      _
    %v98 = vld [vmem:[#allocation2] sm:$0xff]
    %v99 = vld [vmem:[#allocation2 + $0x8] sm:$0xff]
    %v100 = vld [vmem:[#allocation7] sm:$0xff]
    %v101 = vld [vmem:[#allocation7 + $0x8] sm:$0xff]
    %v102 = vld [vmem:[#allocation7 + $0x10] sm:$0xff]
    %v103 = vld [vmem:[#allocation7 + $0x18] sm:$0xff]
    %v104 = vld [vmem:[%s3] sm:$0x1]
    %v106 = vlaneseq
    %v107 = vshrl.u32 %v106, 7
    %v108 = vsub.s32 0, %v107
    %v109 = vrot.slane %v104, %v108
    %vm111 = vcmask 261120
    %v113 = vsel %vm111, %v98, 0
    %v116 = vsel %vm111, %v99, 0
    %118 = vmatprep.subr.mxu0 0.0
    %119 = vmatpush1.msra.mxu0 %v100
    %120 = vmatprep.subr.mxu0 0.0
    %121 = vmatpush1.msra.mxu0 %v101
    %122 = vmatprep.subr.mxu0 0.0
    %123 = vmatpush1.msra.mxu0 %v102
    %124 = vmatprep.subr.mxu0 0.0
    %125 = vmatpush1.msra.mxu0 %v103
    %126 = vmatprep.subr.mxu0 0.0
    %127 = vmatpush1.msra.mxu0 0.0
    %128 = vmatprep.subr.mxu0 0.0
    %129 = vmatpush1.msra.mxu0 0.0
    %130 = vmatprep.subr.mxu0 0.0
    %131 = vmatpush1.msra.mxu0 0.0
    %132 = vmatprep.subr.mxu0 0.0
    %133 = vmatpush1.msra.mxu0 0.0
    %134 = vmatprep.subr.mxu0 0.0
    %135 = vmatpush1.msra.mxu0 0.0
    %136 = vmatprep.subr.mxu0 0.0
    %137 = vmatpush1.msra.mxu0 0.0
    %138 = vmatprep.subr.mxu0 0.0
    %139 = vmatpush1.msra.mxu0 0.0
    %140 = vmatprep.subr.mxu0 0.0
    %141 = vmatpush1.msra.mxu0 0.0
    %142 = vmatprep.subr.mxu0 0.0
    %143 = vmatpush1.msra.mxu0 0.0
    %144 = vmatprep.subr.mxu0 0.0
    %145 = vmatpush1.msra.mxu0 0.0
    %146 = vmatprep.subr.mxu0 0.0
    %147 = vmatpush1.msra.mxu0 0.0
    %148 = vmatprep.subr.mxu0 0.0
    %149 = vmatpush1.msra.mxu0 0.0
    %150 = vmatprep.subr.mxu0 0.0
    %151 = vmatpush1.msra.mxu0 0.0
    %152 = vmatprep.subr.mxu0 0.0
    %153 = vmatpush1.msra.mxu0 0.0
    %154 = vmatprep.subr.mxu0 0.0
    %155 = vmatpush1.msra.mxu0 0.0
    %156 = vmatprep.subr.mxu0 0.0
    %157 = vmatpush1.msra.mxu0 0.0
    %158 = vmatprep.subr.mxu0 0.0
    %159 = vmatpush1.msra.mxu0 0.0
    %160 = vmatprep.subr.mxu0 0.0
    %161 = vmatpush1.msra.mxu0 0.0
    %162 = vmatprep.subr.mxu0 0.0
    %163 = vmatpush1.msra.mxu0 0.0
    %164 = vmatprep.subr.mxu0 0.0
    %165 = vmatpush1.msra.mxu0 0.0
    %166 = vmatprep.subr.mxu0 0.0
    %167 = vmatpush1.msra.mxu0 0.0
    %168 = vmatprep.subr.mxu0 0.0
    %169 = vmatpush1.msra.mxu0 0.0
    %170 = vmatprep.subr.mxu0 0.0
    %171 = vmatpush1.msra.mxu0 0.0
    %172 = vmatprep.subr.mxu0 0.0
    %173 = vmatpush1.msra.mxu0 0.0
    %174 = vmatprep.subr.mxu0 0.0
    %175 = vmatpush1.msra.mxu0 0.0
    %176 = vmatprep.subr.mxu0 0.0
    %177 = vmatpush1.msra.mxu0 0.0
    %178 = vmatprep.subr.mxu0 0.0
    %179 = vmatpush1.msra.mxu0 0.0
    %180 = vmatprep.subr.mxu0 0.0
    %181 = vmatpush1.msra.mxu0 0.0
    %182 = vmatprep.mubr.f32.mxu0 0.0
    %183 = vmatmul.mubr.f32.gmra.mrb[0].mxu0 %v113
    %v184 = vpop.f32.mrb[0].mxu0
    %v185 = vadd.f32 %v109, %v184
    %v186 = vpop.f32.mrb[0].mxu0
    %187 = vmatprep.mubr.f32.mxu0 0.0
    %188 = vmatmul.mubr.f32.gmra.mrb[0].mxu0 %v116
    %v189 = vpop.f32.mrb[0].mxu0
    %v190 = vadd.f32 %v109, %v189
    %v191 = vpop.f32.mrb[0].mxu0
    %192 = vdwg.mxu0
    %v193 = vld [vmem:[#allocation10] sm:$0xff]
    %v194 = vld [vmem:[#allocation10 + $0x8] sm:$0xff]
    %v195 = vld [vmem:[#allocation10 + $0x10] sm:$0xff]
    %v196 = vld [vmem:[#allocation10 + $0x18] sm:$0xff]
    %201 = vrot.lane.b32.xlu0 %v193, 32
    %v202 = vpop.permute.xlu0 %201
    %203 = vrot.lane.b32.xlu0 %v194, 32
    %v204 = vpop.permute.xlu0 %203
    %205 = vrot.lane.b32.xlu0 %v195, 32
    %v206 = vpop.permute.xlu0 %205
    %207 = vrot.lane.b32.xlu0 %v196, 32
    %v208 = vpop.permute.xlu0 %207
    %v213 = vmul.f32 %v185, %v202
    %v214 = vmul.f32 %v185, %v204
    %v215 = vmul.f32 %v185, %v206
    %v216 = vmul.f32 %v185, %v208
    %v217 = vmul.f32 %v190, %v202
    %v218 = vmul.f32 %v190, %v204
    %v219 = vmul.f32 %v190, %v206
    %v220 = vmul.f32 %v190, %v208
    %221 = vrot.lane.b32.xlu0 %v193, 64
    %v222 = vpop.permute.xlu0 %221
    %223 = vrot.lane.b32.xlu0 %v194, 64
    %v224 = vpop.permute.xlu0 %223
    %225 = vrot.lane.b32.xlu0 %v195, 64
    %v226 = vpop.permute.xlu0 %225
    %227 = vrot.lane.b32.xlu0 %v196, 64
    %v228 = vpop.permute.xlu0 %227
    %v233 = vmul.f32 %v185, %v222
    %v234 = vmul.f32 %v185, %v224
    %v235 = vmul.f32 %v185, %v226
    %v236 = vmul.f32 %v185, %v228
    %v237 = vmul.f32 %v190, %v222
    %v238 = vmul.f32 %v190, %v224
    %v239 = vmul.f32 %v190, %v226
    %v240 = vmul.f32 %v190, %v228
    %v241 = vld [vmem:[%s6] sm:$0xff]
    %v242 = vld [vmem:[%s6 + $0x8] sm:$0xff]
    %v243 = vld [vmem:[#allocation5] sm:$0xff]
    %v244 = vld [vmem:[#allocation5 + $0x8] sm:$0xff]
    %v245 = vld [vmem:[#allocation5 + $0x10] sm:$0xff]
    %v246 = vld [vmem:[#allocation5 + $0x18] sm:$0xff]
    %v247 = vld [vmem:[#allocation5 + $0x20] sm:$0xff]
    %v248 = vld [vmem:[#allocation5 + $0x28] sm:$0xff]
    %251 = vrot.lane.b32.xlu0 %v243, 8
    %v252 = vpop.permute.xlu0 %251
    %253 = vrot.lane.b32.xlu0 %v246, 8
    %v254 = vpop.permute.xlu0 %253
    %257 = vrot.lane.b32.xlu0 %v243, 16
    %v258 = vpop.permute.xlu0 %257
    %259 = vrot.lane.b32.xlu0 %v246, 16
    %v260 = vpop.permute.xlu0 %259
    %263 = vrot.lane.b32.xlu0 %v243, 24
    %v264 = vpop.permute.xlu0 %263
    %265 = vrot.lane.b32.xlu0 %v246, 24
    %v266 = vpop.permute.xlu0 %265
    %vm269 = vcmask 64512
    %v270 = vsel %vm269, %v243, %v252
    %v271 = vsel %vm269, %v246, %v254
    %vm272 = vcmask 130048
    %v273 = vsel %vm272, %v270, %v258
    %v274 = vsel %vm272, %v271, %v260
    %vm275 = vcmask 195584
    %v276 = vsel %vm275, %v273, %v264
    %v277 = vsel %vm275, %v274, %v266
    %280 = vrot.lane.b32.xlu0 %v244, 8
    %v281 = vpop.permute.xlu0 %280
    %282 = vrot.lane.b32.xlu0 %v247, 8
    %v283 = vpop.permute.xlu0 %282
    %286 = vrot.lane.b32.xlu0 %v244, 16
    %v287 = vpop.permute.xlu0 %286
    %288 = vrot.lane.b32.xlu0 %v247, 16
    %v289 = vpop.permute.xlu0 %288
    %292 = vrot.lane.b32.xlu0 %v244, 24
    %v293 = vpop.permute.xlu0 %292
    %294 = vrot.lane.b32.xlu0 %v247, 24
    %v295 = vpop.permute.xlu0 %294
    %v298 = vsel %vm269, %v244, %v281
    %v299 = vsel %vm269, %v247, %v283
    %v300 = vsel %vm272, %v298, %v287
    %v301 = vsel %vm272, %v299, %v289
    %v302 = vsel %vm275, %v300, %v293
    %v303 = vsel %vm275, %v301, %v295
    %306 = vrot.lane.b32.xlu0 %v245, 8
    %v307 = vpop.permute.xlu0 %306
    %308 = vrot.lane.b32.xlu0 %v248, 8
    %v309 = vpop.permute.xlu0 %308
    %312 = vrot.lane.b32.xlu0 %v245, 16
    %v313 = vpop.permute.xlu0 %312
    %314 = vrot.lane.b32.xlu0 %v248, 16
    %v315 = vpop.permute.xlu0 %314
    %318 = vrot.lane.b32.xlu0 %v245, 24
    %v319 = vpop.permute.xlu0 %318
    %320 = vrot.lane.b32.xlu0 %v248, 24
    %v321 = vpop.permute.xlu0 %320
    %v324 = vsel %vm269, %v245, %v307
    %v325 = vsel %vm269, %v248, %v309
    %v326 = vsel %vm272, %v324, %v313
    %v327 = vsel %vm272, %v325, %v315
    %v328 = vsel %vm275, %v326, %v319
    %v329 = vsel %vm275, %v327, %v321
    %v330 = vlaneseq
    %v331 = vshrl.u32 %v330, 7
    %v332 = vsub.s32 0, %v331
    %v333 = vrot.slane %v241, %v332
    %v334 = vmul.f32 %v276, %v333
    %v335 = vmul.f32 %v277, %v333
    %v336 = vlaneseq
    %v337 = vshrl.u32 %v336, 7
    %v338 = vsub.s32 1, %v337
    %v339 = vrot.slane %v241, %v338
    %v340 = vmul.f32 %v302, %v339
    %v341 = vmul.f32 %v303, %v339
    %v342 = vadd.f32 %v334, %v340
    %v343 = vadd.f32 %v335, %v341
    %v344 = vlaneseq
    %v345 = vshrl.u32 %v344, 7
    %v346 = vsub.s32 2, %v345
    %v347 = vrot.slane %v241, %v346
    %v348 = vmul.f32 %v328, %v347
    %v349 = vmul.f32 %v329, %v347
    %v350 = vadd.f32 %v342, %v348
    %v351 = vadd.f32 %v343, %v349
    %v352 = vlaneseq
    %v353 = vshrl.u32 %v352, 7
    %v354 = vsub.s32 1, %v353
    %v355 = vrot.slane %v242, %v354
    %v356 = vadd.f32 %v350, %v355
    %v357 = vadd.f32 %v351, %v355
    %v358 = vmax.f32 %v356, 0.0
    %v359 = vmax.f32 %v357, 0.0
    %v360 = vlaneseq
    %v361 = vshrl.u32 %v360, 7
    %v362 = vsub.s32 3, %v361
    %v363 = vrot.slane %v241, %v362
    %v364 = vmul.f32 %v276, %v363
    %v365 = vmul.f32 %v277, %v363
    %v366 = vlaneseq
    %v367 = vshrl.u32 %v366, 7
    %v368 = vsub.s32 4, %v367
    %v369 = vrot.slane %v241, %v368
    %v370 = vmul.f32 %v302, %v369
    %v371 = vmul.f32 %v303, %v369
    %v372 = vadd.f32 %v364, %v370
    %v373 = vadd.f32 %v365, %v371
    %v374 = vlaneseq
    %v375 = vshrl.u32 %v374, 7
    %v376 = vsub.s32 5, %v375
    %v377 = vrot.slane %v241, %v376
    %v378 = vmul.f32 %v328, %v377
    %v379 = vmul.f32 %v329, %v377
    %v380 = vadd.f32 %v372, %v378
    %v381 = vadd.f32 %v373, %v379
    %v382 = vlaneseq
    %v383 = vshrl.u32 %v382, 7
    %v384 = vsub.s32 2, %v383
    %v385 = vrot.slane %v242, %v384
    %v386 = vadd.f32 %v380, %v385
    %v387 = vadd.f32 %v381, %v385
    %v388 = vmax.f32 %v386, 0.0
    %v389 = vmax.f32 %v387, 0.0
    %v390 = vlaneseq
    %v391 = vshrl.u32 %v390, 7
    %v392 = vsub.s32 6, %v391
    %v393 = vrot.slane %v241, %v392
    %v394 = vmul.f32 %v276, %v393
    %v395 = vmul.f32 %v277, %v393
    %v396 = vlaneseq
    %v397 = vshrl.u32 %v396, 7
    %v398 = vsub.s32 7, %v397
    %v399 = vrot.slane %v241, %v398
    %v400 = vmul.f32 %v302, %v399
    %v401 = vmul.f32 %v303, %v399
    %v402 = vadd.f32 %v394, %v400
    %v403 = vadd.f32 %v395, %v401
    %v404 = vlaneseq
    %v405 = vshrl.u32 %v404, 7
    %v406 = vsub.s32 0, %v405
    %v407 = vrot.slane %v242, %v406
    %v408 = vmul.f32 %v328, %v407
    %v409 = vmul.f32 %v329, %v407
    %v410 = vadd.f32 %v402, %v408
    %v411 = vadd.f32 %v403, %v409
    %v412 = vlaneseq
    %v413 = vshrl.u32 %v412, 7
    %v414 = vsub.s32 3, %v413
    %v415 = vrot.slane %v242, %v414
    %v416 = vadd.f32 %v410, %v415
    %v417 = vadd.f32 %v411, %v415
    %v418 = vmax.f32 %v416, 0.0
    %v419 = vmax.f32 %v417, 0.0
    %v420 = vlaneseq
    %v421 = vshrl.u32 %v420, 7
    %v422 = vsub.s32 4, %v421
    %v423 = vrot.slane %v242, %v422
    %v424 = vmul.f32 %v358, %v423
    %v425 = vmul.f32 %v359, %v423
    %v426 = vlaneseq
    %v427 = vshrl.u32 %v426, 7
    %v428 = vsub.s32 5, %v427
    %v429 = vrot.slane %v242, %v428
    %v430 = vmul.f32 %v388, %v429
    %v431 = vmul.f32 %v389, %v429
    %v432 = vadd.f32 %v424, %v430
    %v433 = vadd.f32 %v425, %v431
    %v434 = vlaneseq
    %v435 = vshrl.u32 %v434, 7
    %v436 = vsub.s32 6, %v435
    %v437 = vrot.slane %v242, %v436
    %v438 = vmul.f32 %v418, %v437
    %v439 = vmul.f32 %v419, %v437
    %v440 = vadd.f32 %v432, %v438
    %v441 = vadd.f32 %v433, %v439
    %v442 = vlaneseq
    %v443 = vshrl.u32 %v442, 7
    %v444 = vsub.s32 7, %v443
    %v445 = vrot.slane %v242, %v444
    %v446 = vadd.f32 %v440, %v445
    %v447 = vadd.f32 %v441, %v445
    %452 = vrot.lane.b32.xlu0 %v213, 96
    %v453 = vpop.permute.xlu0 %452
    %454 = vrot.lane.b32.xlu0 %v214, 96
    %v455 = vpop.permute.xlu0 %454
    %456 = vrot.lane.b32.xlu0 %v215, 96
    %v457 = vpop.permute.xlu0 %456
    %458 = vrot.lane.b32.xlu0 %v216, 96
    %v459 = vpop.permute.xlu0 %458
    %v461 = vsel %vm111, %v185, 0
    %v463 = vsel %vm111, %v453, 0
    %v465 = vsel %vm111, %v455, 0
    %v467 = vsel %vm111, %v457, 0
    %v469 = vsel %vm111, %v459, 0
    %471 = vmatprep.subr.mxu0 0.0
    %472 = vmatpush1.xpose.msra.mxu0 %v463
    %473 = vmatprep.subr.mxu0 0.0
    %474 = vmatpush1.xpose.msra.mxu0 %v465
    %475 = vmatprep.subr.mxu0 0.0
    %476 = vmatpush1.xpose.msra.mxu0 %v467
    %477 = vmatprep.subr.mxu0 0.0
    %478 = vmatpush1.xpose.msra.mxu0 %v469
    %479 = vmatprep.subr.mxu0 0.0
    %480 = vmatpush1.xpose.msra.mxu0 0.0
    %481 = vmatprep.subr.mxu0 0.0
    %482 = vmatpush1.xpose.msra.mxu0 0.0
    %483 = vmatprep.subr.mxu0 0.0
    %484 = vmatpush1.xpose.msra.mxu0 0.0
    %485 = vmatprep.subr.mxu0 0.0
    %486 = vmatpush1.xpose.msra.mxu0 0.0
    %487 = vmatprep.subr.mxu0 0.0
    %488 = vmatpush1.xpose.msra.mxu0 0.0
    %489 = vmatprep.subr.mxu0 0.0
    %490 = vmatpush1.xpose.msra.mxu0 0.0
    %491 = vmatprep.subr.mxu0 0.0
    %492 = vmatpush1.xpose.msra.mxu0 0.0
    %493 = vmatprep.subr.mxu0 0.0
    %494 = vmatpush1.xpose.msra.mxu0 0.0
    %495 = vmatprep.subr.mxu0 0.0
    %496 = vmatpush1.xpose.msra.mxu0 0.0
    %497 = vmatprep.subr.mxu0 0.0
    %498 = vmatpush1.xpose.msra.mxu0 0.0
    %499 = vmatprep.subr.mxu0 0.0
    %500 = vmatpush1.xpose.msra.mxu0 0.0
    %501 = vmatprep.subr.mxu0 0.0
    %502 = vmatpush1.xpose.msra.mxu0 0.0
    %503 = vmatprep.subr.mxu0 0.0
    %504 = vmatpush1.xpose.msra.mxu0 0.0
    %505 = vmatprep.subr.mxu0 0.0
    %506 = vmatpush1.xpose.msra.mxu0 0.0
    %507 = vmatprep.subr.mxu0 0.0
    %508 = vmatpush1.xpose.msra.mxu0 0.0
    %509 = vmatprep.subr.mxu0 0.0
    %510 = vmatpush1.xpose.msra.mxu0 0.0
    %511 = vmatprep.subr.mxu0 0.0
    %512 = vmatpush1.xpose.msra.mxu0 0.0
    %513 = vmatprep.subr.mxu0 0.0
    %514 = vmatpush1.xpose.msra.mxu0 0.0
    %515 = vmatprep.subr.mxu0 0.0
    %516 = vmatpush1.xpose.msra.mxu0 0.0
    %517 = vmatprep.subr.mxu0 0.0
    %518 = vmatpush1.xpose.msra.mxu0 0.0
    %519 = vmatprep.subr.mxu0 0.0
    %520 = vmatpush1.xpose.msra.mxu0 0.0
    %521 = vmatprep.subr.mxu0 0.0
    %522 = vmatpush1.xpose.msra.mxu0 0.0
    %523 = vmatprep.subr.mxu0 0.0
    %524 = vmatpush1.xpose.msra.mxu0 0.0
    %525 = vmatprep.subr.mxu0 0.0
    %526 = vmatpush1.xpose.msra.mxu0 0.0
    %527 = vmatprep.subr.mxu0 0.0
    %528 = vmatpush1.xpose.msra.mxu0 0.0
    %529 = vmatprep.subr.mxu0 0.0
    %530 = vmatpush1.xpose.msra.mxu0 0.0
    %531 = vmatprep.subr.mxu0 0.0
    %532 = vmatpush1.xpose.msra.mxu0 0.0
    %533 = vmatprep.subr.mxu0 0.0
    %534 = vmatpush1.xpose.msra.mxu0 0.0
    %535 = vmatprep.mubr.f32.mxu0 0.0
    %536 = vmatmul.mubr.f32.gmra.mrb[0].mxu0 %v461
    %v537 = vpop.f32.mrb[0].mxu0
    %v538 = vadd.f32 %v446, %v537
    %v539 = vpop.f32.mrb[0].mxu0
    %540 = vdwg.mxu0
    %545 = vrot.lane.b32.xlu0 %v217, 96
    %v546 = vpop.permute.xlu0 %545
    %547 = vrot.lane.b32.xlu0 %v218, 96
    %v548 = vpop.permute.xlu0 %547
    %549 = vrot.lane.b32.xlu0 %v219, 96
    %v550 = vpop.permute.xlu0 %549
    %551 = vrot.lane.b32.xlu0 %v220, 96
    %v552 = vpop.permute.xlu0 %551
    %v554 = vsel %vm111, %v190, 0
    %v556 = vsel %vm111, %v546, 0
    %v558 = vsel %vm111, %v548, 0
    %v560 = vsel %vm111, %v550, 0
    %v562 = vsel %vm111, %v552, 0
    %564 = vmatprep.subr.mxu0 0.0
    %565 = vmatpush1.xpose.msra.mxu0 %v556
    %566 = vmatprep.subr.mxu0 0.0
    %567 = vmatpush1.xpose.msra.mxu0 %v558
    %568 = vmatprep.subr.mxu0 0.0
    %569 = vmatpush1.xpose.msra.mxu0 %v560
    %570 = vmatprep.subr.mxu0 0.0
    %571 = vmatpush1.xpose.msra.mxu0 %v562
    %572 = vmatprep.subr.mxu0 0.0
    %573 = vmatpush1.xpose.msra.mxu0 0.0
    %574 = vmatprep.subr.mxu0 0.0
    %575 = vmatpush1.xpose.msra.mxu0 0.0
    %576 = vmatprep.subr.mxu0 0.0
    %577 = vmatpush1.xpose.msra.mxu0 0.0
    %578 = vmatprep.subr.mxu0 0.0
    %579 = vmatpush1.xpose.msra.mxu0 0.0
    %580 = vmatprep.subr.mxu0 0.0
    %581 = vmatpush1.xpose.msra.mxu0 0.0
    %582 = vmatprep.subr.mxu0 0.0
    %583 = vmatpush1.xpose.msra.mxu0 0.0
    %584 = vmatprep.subr.mxu0 0.0
    %585 = vmatpush1.xpose.msra.mxu0 0.0
    %586 = vmatprep.subr.mxu0 0.0
    %587 = vmatpush1.xpose.msra.mxu0 0.0
    %588 = vmatprep.subr.mxu0 0.0
    %589 = vmatpush1.xpose.msra.mxu0 0.0
    %590 = vmatprep.subr.mxu0 0.0
    %591 = vmatpush1.xpose.msra.mxu0 0.0
    %592 = vmatprep.subr.mxu0 0.0
    %593 = vmatpush1.xpose.msra.mxu0 0.0
    %594 = vmatprep.subr.mxu0 0.0
    %595 = vmatpush1.xpose.msra.mxu0 0.0
    %596 = vmatprep.subr.mxu0 0.0
    %597 = vmatpush1.xpose.msra.mxu0 0.0
    %598 = vmatprep.subr.mxu0 0.0
    %599 = vmatpush1.xpose.msra.mxu0 0.0
    %600 = vmatprep.subr.mxu0 0.0
    %601 = vmatpush1.xpose.msra.mxu0 0.0
    %602 = vmatprep.subr.mxu0 0.0
    %603 = vmatpush1.xpose.msra.mxu0 0.0
    %604 = vmatprep.subr.mxu0 0.0
    %605 = vmatpush1.xpose.msra.mxu0 0.0
    %606 = vmatprep.subr.mxu0 0.0
    %607 = vmatpush1.xpose.msra.mxu0 0.0
    %608 = vmatprep.subr.mxu0 0.0
    %609 = vmatpush1.xpose.msra.mxu0 0.0
    %610 = vmatprep.subr.mxu0 0.0
    %611 = vmatpush1.xpose.msra.mxu0 0.0
    %612 = vmatprep.subr.mxu0 0.0
    %613 = vmatpush1.xpose.msra.mxu0 0.0
    %614 = vmatprep.subr.mxu0 0.0
    %615 = vmatpush1.xpose.msra.mxu0 0.0
    %616 = vmatprep.subr.mxu0 0.0
    %617 = vmatpush1.xpose.msra.mxu0 0.0
    %618 = vmatprep.subr.mxu0 0.0
    %619 = vmatpush1.xpose.msra.mxu0 0.0
    %620 = vmatprep.subr.mxu0 0.0
    %621 = vmatpush1.xpose.msra.mxu0 0.0
    %622 = vmatprep.subr.mxu0 0.0
    %623 = vmatpush1.xpose.msra.mxu0 0.0
    %624 = vmatprep.subr.mxu0 0.0
    %625 = vmatpush1.xpose.msra.mxu0 0.0
    %626 = vmatprep.subr.mxu0 0.0
    %627 = vmatpush1.xpose.msra.mxu0 0.0
    %628 = vmatprep.mubr.f32.mxu0 0.0
    %629 = vmatmul.mubr.f32.gmra.mrb[0].mxu0 %v554
    %v630 = vpop.f32.mrb[0].mxu0
    %v631 = vadd.f32 %v447, %v630
    %v632 = vpop.f32.mrb[0].mxu0
    %633 = vdwg.mxu0
    %v634 = vsel %vm269, %v538, -inf
    %635 = vmax.xlane.f32.xlu0 %v634
    %v636 = vpop.xlane.xlu0 %635
    %v637 = vsel %vm269, %v631, -inf
    %638 = vmax.xlane.f32.xlu0 %v637
    %v639 = vpop.xlane.xlu0 %638
    %v640 = vsub.f32 %v538, %v636
    %v641 = vsub.f32 %v631, %v639
    %v642 = vmul.f32 %v640, 1.442695
    %v643 = vpow.pop %v642
    %v644 = vmul.f32 %v641, 1.442695
    %v645 = vpow.pop %v644
    %v646 = vsel %vm269, %v643, 0.0
    %647 = vadd.xlane.f32.xlu0 %v646
    %v648 = vpop.xlane.xlu0 %647
    %v649 = vsel %vm269, %v645, 0.0
    %650 = vadd.xlane.f32.xlu0 %v649
    %v651 = vpop.xlane.xlu0 %650
    %v652 = vrcp.pop %v648
    %v653 = vrcp.pop %v651
    %v654 = vmul.f32 %v648, %v652
    %v655 = vmul.f32 %v651, %v653
    %v656 = vsub.f32 2.0, %v654
    %v657 = vsub.f32 2.0, %v655
    %v658 = vmul.f32 %v652, %v656
    %v659 = vmul.f32 %v653, %v657
    %v660 = vmul.f32 %v643, %v658
    %v661 = vmul.f32 %v645, %v659
    %vm662 = vcmask 130112
    %v663 = vsel %vm662, %v538, -inf
    %664 = vmax.xlane.f32.xlu0 %v663
    %v665 = vpop.xlane.xlu0 %664
    %v666 = vsel %vm662, %v631, -inf
    %667 = vmax.xlane.f32.xlu0 %v666
    %v668 = vpop.xlane.xlu0 %667
    %v669 = vsub.f32 %v538, %v665
    %v670 = vsub.f32 %v631, %v668
    %v671 = vmul.f32 %v669, 1.442695
    %v672 = vpow.pop %v671
    %v673 = vmul.f32 %v670, 1.442695
    %v674 = vpow.pop %v673
    %677 = vrot.lane.b32.xlu0 %v672, 120
    %v678 = vpop.permute.xlu0 %677
    %679 = vrot.lane.b32.xlu0 %v674, 120
    %v680 = vpop.permute.xlu0 %679
    %v683 = vsel %vm269, %v678, 0.0
    %684 = vadd.xlane.f32.xlu0 %v683
    %v685 = vpop.xlane.xlu0 %684
    %v686 = vsel %vm269, %v680, 0.0
    %687 = vadd.xlane.f32.xlu0 %v686
    %v688 = vpop.xlane.xlu0 %687
    %v689 = vrcp.pop %v685
    %v690 = vrcp.pop %v688
    %v691 = vmul.f32 %v685, %v689
    %v692 = vmul.f32 %v688, %v690
    %v693 = vsub.f32 2.0, %v691
    %v694 = vsub.f32 2.0, %v692
    %v695 = vmul.f32 %v689, %v693
    %v696 = vmul.f32 %v690, %v694
    %v697 = vmul.f32 %v672, %v695
    %v698 = vmul.f32 %v674, %v696
    %vm699 = vcmask 195712
    %v700 = vsel %vm699, %v538, -inf
    %701 = vmax.xlane.f32.xlu0 %v700
    %v702 = vpop.xlane.xlu0 %701
    %v703 = vsel %vm699, %v631, -inf
    %704 = vmax.xlane.f32.xlu0 %v703
    %v705 = vpop.xlane.xlu0 %704
    %v706 = vsub.f32 %v538, %v702
    %v707 = vsub.f32 %v631, %v705
    %v708 = vmul.f32 %v706, 1.442695
    %v709 = vpow.pop %v708
    %v710 = vmul.f32 %v707, 1.442695
    %v711 = vpow.pop %v710
    %714 = vrot.lane.b32.xlu0 %v709, 112
    %v715 = vpop.permute.xlu0 %714
    %716 = vrot.lane.b32.xlu0 %v711, 112
    %v717 = vpop.permute.xlu0 %716
    %v720 = vsel %vm269, %v715, 0.0
    %721 = vadd.xlane.f32.xlu0 %v720
    %v722 = vpop.xlane.xlu0 %721
    %v723 = vsel %vm269, %v717, 0.0
    %724 = vadd.xlane.f32.xlu0 %v723
    %v725 = vpop.xlane.xlu0 %724
    %v726 = vrcp.pop %v722
    %v727 = vrcp.pop %v725
    %v728 = vmul.f32 %v722, %v726
    %v729 = vmul.f32 %v725, %v727
    %v730 = vsub.f32 2.0, %v728
    %v731 = vsub.f32 2.0, %v729
    %v732 = vmul.f32 %v726, %v730
    %v733 = vmul.f32 %v727, %v731
    %v734 = vmul.f32 %v709, %v732
    %v735 = vmul.f32 %v711, %v733
    %vm736 = vcmask 261312
    %v737 = vsel %vm736, %v538, -inf
    %738 = vmax.xlane.f32.xlu0 %v737
    %v739 = vpop.xlane.xlu0 %738
    %v740 = vsel %vm736, %v631, -inf
    %741 = vmax.xlane.f32.xlu0 %v740
    %v742 = vpop.xlane.xlu0 %741
    %v743 = vsub.f32 %v538, %v739
    %v744 = vsub.f32 %v631, %v742
    %v745 = vmul.f32 %v743, 1.442695
    %v746 = vpow.pop %v745
    %v747 = vmul.f32 %v744, 1.442695
    %v748 = vpow.pop %v747
    %751 = vrot.lane.b32.xlu0 %v746, 104
    %v752 = vpop.permute.xlu0 %751
    %753 = vrot.lane.b32.xlu0 %v748, 104
    %v754 = vpop.permute.xlu0 %753
    %v757 = vsel %vm269, %v752, 0.0
    %758 = vadd.xlane.f32.xlu0 %v757
    %v759 = vpop.xlane.xlu0 %758
    %v760 = vsel %vm269, %v754, 0.0
    %761 = vadd.xlane.f32.xlu0 %v760
    %v762 = vpop.xlane.xlu0 %761
    %v763 = vrcp.pop %v759
    %v764 = vrcp.pop %v762
    %v765 = vmul.f32 %v759, %v763
    %v766 = vmul.f32 %v762, %v764
    %v767 = vsub.f32 2.0, %v765
    %v768 = vsub.f32 2.0, %v766
    %v769 = vmul.f32 %v763, %v767
    %v770 = vmul.f32 %v764, %v768
    %v771 = vmul.f32 %v746, %v769
    %v772 = vmul.f32 %v748, %v770
    %v773 = vsel %vm269, %v660, %v697
    %v774 = vsel %vm269, %v661, %v698
    %v775 = vsel %vm272, %v773, %v734
    %v776 = vsel %vm272, %v774, %v735
    %v777 = vsel %vm275, %v775, %v771
    %v778 = vsel %vm275, %v776, %v772
    %783 = vrot.lane.b32.xlu0 %v233, 64
    %v784 = vpop.permute.xlu0 %783
    %785 = vrot.lane.b32.xlu0 %v234, 64
    %v786 = vpop.permute.xlu0 %785
    %787 = vrot.lane.b32.xlu0 %v235, 64
    %v788 = vpop.permute.xlu0 %787
    %789 = vrot.lane.b32.xlu0 %v236, 64
    %v790 = vpop.permute.xlu0 %789
    %v796 = vsel %vm111, %v777, 0
    %798 = vmatprep.subr.mxu0 0.0
    %799 = vmatpush1.msra.mxu0 %v784
    %800 = vmatprep.subr.mxu0 0.0
    %801 = vmatpush1.msra.mxu0 %v786
    %802 = vmatprep.subr.mxu0 0.0
    %803 = vmatpush1.msra.mxu0 %v788
    %804 = vmatprep.subr.mxu0 0.0
    %805 = vmatpush1.msra.mxu0 %v790
    %806 = vmatprep.subr.mxu0 0.0
    %807 = vmatpush1.msra.mxu0 0.0
    %808 = vmatprep.subr.mxu0 0.0
    %809 = vmatpush1.msra.mxu0 0.0
    %810 = vmatprep.subr.mxu0 0.0
    %811 = vmatpush1.msra.mxu0 0.0
    %812 = vmatprep.subr.mxu0 0.0
    %813 = vmatpush1.msra.mxu0 0.0
    %814 = vmatprep.subr.mxu0 0.0
    %815 = vmatpush1.msra.mxu0 0.0
    %816 = vmatprep.subr.mxu0 0.0
    %817 = vmatpush1.msra.mxu0 0.0
    %818 = vmatprep.subr.mxu0 0.0
    %819 = vmatpush1.msra.mxu0 0.0
    %820 = vmatprep.subr.mxu0 0.0
    %821 = vmatpush1.msra.mxu0 0.0
    %822 = vmatprep.subr.mxu0 0.0
    %823 = vmatpush1.msra.mxu0 0.0
    %824 = vmatprep.subr.mxu0 0.0
    %825 = vmatpush1.msra.mxu0 0.0
    %826 = vmatprep.subr.mxu0 0.0
    %827 = vmatpush1.msra.mxu0 0.0
    %828 = vmatprep.subr.mxu0 0.0
    %829 = vmatpush1.msra.mxu0 0.0
    %830 = vmatprep.subr.mxu0 0.0
    %831 = vmatpush1.msra.mxu0 0.0
    %832 = vmatprep.subr.mxu0 0.0
    %833 = vmatpush1.msra.mxu0 0.0
    %834 = vmatprep.subr.mxu0 0.0
    %835 = vmatpush1.msra.mxu0 0.0
    %836 = vmatprep.subr.mxu0 0.0
    %837 = vmatpush1.msra.mxu0 0.0
    %838 = vmatprep.subr.mxu0 0.0
    %839 = vmatpush1.msra.mxu0 0.0
    %840 = vmatprep.subr.mxu0 0.0
    %841 = vmatpush1.msra.mxu0 0.0
    %842 = vmatprep.subr.mxu0 0.0
    %843 = vmatpush1.msra.mxu0 0.0
    %844 = vmatprep.subr.mxu0 0.0
    %845 = vmatpush1.msra.mxu0 0.0
    %846 = vmatprep.subr.mxu0 0.0
    %847 = vmatpush1.msra.mxu0 0.0
    %848 = vmatprep.subr.mxu0 0.0
    %849 = vmatpush1.msra.mxu0 0.0
    %850 = vmatprep.subr.mxu0 0.0
    %851 = vmatpush1.msra.mxu0 0.0
    %852 = vmatprep.subr.mxu0 0.0
    %853 = vmatpush1.msra.mxu0 0.0
    %854 = vmatprep.subr.mxu0 0.0
    %855 = vmatpush1.msra.mxu0 0.0
    %856 = vmatprep.subr.mxu0 0.0
    %857 = vmatpush1.msra.mxu0 0.0
    %858 = vmatprep.subr.mxu0 0.0
    %859 = vmatpush1.msra.mxu0 0.0
    %860 = vmatprep.subr.mxu0 0.0
    %861 = vmatpush1.msra.mxu0 0.0
    %862 = vmatprep.mubr.f32.mxu0 0.0
    %863 = vmatmul.mubr.f32.gmra.mrb[0].mxu0 %v796
    %v864 = vpop.f32.mrb[0].mxu0
    %v865 = vadd.f32 0.0, %v864
    %v866 = vpop.f32.mrb[0].mxu0
    %867 = vdwg.mxu0
    %872 = vrot.lane.b32.xlu0 %v237, 64
    %v873 = vpop.permute.xlu0 %872
    %874 = vrot.lane.b32.xlu0 %v238, 64
    %v875 = vpop.permute.xlu0 %874
    %876 = vrot.lane.b32.xlu0 %v239, 64
    %v877 = vpop.permute.xlu0 %876
    %878 = vrot.lane.b32.xlu0 %v240, 64
    %v879 = vpop.permute.xlu0 %878
    %v885 = vsel %vm111, %v778, 0
    %887 = vmatprep.subr.mxu0 0.0
    %888 = vmatpush1.msra.mxu0 %v873
    %889 = vmatprep.subr.mxu0 0.0
    %890 = vmatpush1.msra.mxu0 %v875
    %891 = vmatprep.subr.mxu0 0.0
    %892 = vmatpush1.msra.mxu0 %v877
    %893 = vmatprep.subr.mxu0 0.0
    %894 = vmatpush1.msra.mxu0 %v879
    %895 = vmatprep.subr.mxu0 0.0
    %896 = vmatpush1.msra.mxu0 0.0
    %897 = vmatprep.subr.mxu0 0.0
    %898 = vmatpush1.msra.mxu0 0.0
    %899 = vmatprep.subr.mxu0 0.0
    %900 = vmatpush1.msra.mxu0 0.0
    %901 = vmatprep.subr.mxu0 0.0
    %902 = vmatpush1.msra.mxu0 0.0
    %903 = vmatprep.subr.mxu0 0.0
    %904 = vmatpush1.msra.mxu0 0.0
    %905 = vmatprep.subr.mxu0 0.0
    %906 = vmatpush1.msra.mxu0 0.0
    %907 = vmatprep.subr.mxu0 0.0
    %908 = vmatpush1.msra.mxu0 0.0
    %909 = vmatprep.subr.mxu0 0.0
    %910 = vmatpush1.msra.mxu0 0.0
    %911 = vmatprep.subr.mxu0 0.0
    %912 = vmatpush1.msra.mxu0 0.0
    %913 = vmatprep.subr.mxu0 0.0
    %914 = vmatpush1.msra.mxu0 0.0
    %915 = vmatprep.subr.mxu0 0.0
    %916 = vmatpush1.msra.mxu0 0.0
    %917 = vmatprep.subr.mxu0 0.0
    %918 = vmatpush1.msra.mxu0 0.0
    %919 = vmatprep.subr.mxu0 0.0
    %920 = vmatpush1.msra.mxu0 0.0
    %921 = vmatprep.subr.mxu0 0.0
    %922 = vmatpush1.msra.mxu0 0.0
    %923 = vmatprep.subr.mxu0 0.0
    %924 = vmatpush1.msra.mxu0 0.0
    %925 = vmatprep.subr.mxu0 0.0
    %926 = vmatpush1.msra.mxu0 0.0
    %927 = vmatprep.subr.mxu0 0.0
    %928 = vmatpush1.msra.mxu0 0.0
    %929 = vmatprep.subr.mxu0 0.0
    %930 = vmatpush1.msra.mxu0 0.0
    %931 = vmatprep.subr.mxu0 0.0
    %932 = vmatpush1.msra.mxu0 0.0
    %933 = vmatprep.subr.mxu0 0.0
    %934 = vmatpush1.msra.mxu0 0.0
    %935 = vmatprep.subr.mxu0 0.0
    %936 = vmatpush1.msra.mxu0 0.0
    %937 = vmatprep.subr.mxu0 0.0
    %938 = vmatpush1.msra.mxu0 0.0
    %939 = vmatprep.subr.mxu0 0.0
    %940 = vmatpush1.msra.mxu0 0.0
    %941 = vmatprep.subr.mxu0 0.0
    %942 = vmatpush1.msra.mxu0 0.0
    %943 = vmatprep.subr.mxu0 0.0
    %944 = vmatpush1.msra.mxu0 0.0
    %945 = vmatprep.subr.mxu0 0.0
    %946 = vmatpush1.msra.mxu0 0.0
    %947 = vmatprep.subr.mxu0 0.0
    %948 = vmatpush1.msra.mxu0 0.0
    %949 = vmatprep.subr.mxu0 0.0
    %950 = vmatpush1.msra.mxu0 0.0
    %951 = vmatprep.mubr.f32.mxu0 0.0
    %952 = vmatmul.mubr.f32.gmra.mrb[0].mxu0 %v885
    %v953 = vpop.f32.mrb[0].mxu0
    %v954 = vadd.f32 0.0, %v953
    %v955 = vpop.f32.mrb[0].mxu0
    %956 = vdwg.mxu0
    %959 = vrot.lane.b32.xlu0 %v865, 64
    %v960 = vpop.permute.xlu0 %959
    %961 = vrot.lane.b32.xlu0 %v954, 64
    %v962 = vpop.permute.xlu0 %961
    %v965 = vadd.f32 %v185, %v960
    %v966 = vadd.f32 %v190, %v962
    %v967 = vld [vmem:[#allocation8] sm:$0xff]
    %v968 = vld [vmem:[#allocation8 + $0x8] sm:$0xff]
    %v969 = vld [vmem:[#allocation8 + $0x10] sm:$0xff]
    %v970 = vld [vmem:[#allocation8 + $0x18] sm:$0xff]
    %v971 = vld [vmem:[%s5] sm:$0x1]
    %v973 = vlaneseq
    %v974 = vshrl.u32 %v973, 7
    %v975 = vsub.s32 0, %v974
    %v976 = vrot.slane %v971, %v975
    %980 = vrot.lane.b32.xlu0 %v965, 64
    %v981 = vpop.permute.xlu0 %980
    %982 = vrot.lane.b32.xlu0 %v966, 64
    %v983 = vpop.permute.xlu0 %982
    %v984 = vsel %vm111, %v981, 0
    %v986 = vsel %vm111, %v983, 0
    %988 = vmatprep.subr.mxu0 0.0
    %989 = vmatpush1.msra.mxu0 %v967
    %990 = vmatprep.subr.mxu0 0.0
    %991 = vmatpush1.msra.mxu0 %v968
    %992 = vmatprep.subr.mxu0 0.0
    %993 = vmatpush1.msra.mxu0 %v969
    %994 = vmatprep.subr.mxu0 0.0
    %995 = vmatpush1.msra.mxu0 %v970
    %996 = vmatprep.subr.mxu0 0.0
    %997 = vmatpush1.msra.mxu0 0.0
    %998 = vmatprep.subr.mxu0 0.0
    %999 = vmatpush1.msra.mxu0 0.0
    %1000 = vmatprep.subr.mxu0 0.0
    %1001 = vmatpush1.msra.mxu0 0.0
    %1002 = vmatprep.subr.mxu0 0.0
    %1003 = vmatpush1.msra.mxu0 0.0
    %1004 = vmatprep.subr.mxu0 0.0
    %1005 = vmatpush1.msra.mxu0 0.0
    %1006 = vmatprep.subr.mxu0 0.0
    %1007 = vmatpush1.msra.mxu0 0.0
    %1008 = vmatprep.subr.mxu0 0.0
    %1009 = vmatpush1.msra.mxu0 0.0
    %1010 = vmatprep.subr.mxu0 0.0
    %1011 = vmatpush1.msra.mxu0 0.0
    %1012 = vmatprep.subr.mxu0 0.0
    %1013 = vmatpush1.msra.mxu0 0.0
    %1014 = vmatprep.subr.mxu0 0.0
    %1015 = vmatpush1.msra.mxu0 0.0
    %1016 = vmatprep.subr.mxu0 0.0
    %1017 = vmatpush1.msra.mxu0 0.0
    %1018 = vmatprep.subr.mxu0 0.0
    %1019 = vmatpush1.msra.mxu0 0.0
    %1020 = vmatprep.subr.mxu0 0.0
    %1021 = vmatpush1.msra.mxu0 0.0
    %1022 = vmatprep.subr.mxu0 0.0
    %1023 = vmatpush1.msra.mxu0 0.0
    %1024 = vmatprep.subr.mxu0 0.0
    %1025 = vmatpush1.msra.mxu0 0.0
    %1026 = vmatprep.subr.mxu0 0.0
    %1027 = vmatpush1.msra.mxu0 0.0
    %1028 = vmatprep.subr.mxu0 0.0
    %1029 = vmatpush1.msra.mxu0 0.0
    %1030 = vmatprep.subr.mxu0 0.0
    %1031 = vmatpush1.msra.mxu0 0.0
    %1032 = vmatprep.subr.mxu0 0.0
    %1033 = vmatpush1.msra.mxu0 0.0
    %1034 = vmatprep.subr.mxu0 0.0
    %1035 = vmatpush1.msra.mxu0 0.0
    %1036 = vmatprep.subr.mxu0 0.0
    %1037 = vmatpush1.msra.mxu0 0.0
    %1038 = vmatprep.subr.mxu0 0.0
    %1039 = vmatpush1.msra.mxu0 0.0
    %1040 = vmatprep.subr.mxu0 0.0
    %1041 = vmatpush1.msra.mxu0 0.0
    %1042 = vmatprep.subr.mxu0 0.0
    %1043 = vmatpush1.msra.mxu0 0.0
    %1044 = vmatprep.subr.mxu0 0.0
    %1045 = vmatpush1.msra.mxu0 0.0
    %1046 = vmatprep.subr.mxu0 0.0
    %1047 = vmatpush1.msra.mxu0 0.0
    %1048 = vmatprep.subr.mxu0 0.0
    %1049 = vmatpush1.msra.mxu0 0.0
    %1050 = vmatprep.subr.mxu0 0.0
    %1051 = vmatpush1.msra.mxu0 0.0
    %1052 = vmatprep.mubr.f32.mxu0 0.0
    %1053 = vmatmul.mubr.f32.gmra.mrb[0].mxu0 %v984
    %v1054 = vpop.f32.mrb[0].mxu0
    %v1055 = vadd.f32 %v976, %v1054
    %v1056 = vpop.f32.mrb[0].mxu0
    %1057 = vmatprep.mubr.f32.mxu0 0.0
    %1058 = vmatmul.mubr.f32.gmra.mrb[0].mxu0 %v986
    %v1059 = vpop.f32.mrb[0].mxu0
    %v1060 = vadd.f32 %v976, %v1059
    %v1061 = vpop.f32.mrb[0].mxu0
    %1062 = vdwg.mxu0
    %v1063 = vmax.f32 %v1055, 0.0
    %v1064 = vmax.f32 %v1060, 0.0
    %1067 = vrot.lane.b32.xlu0 %v1063, 64
    %v1068 = vpop.permute.xlu0 %1067
    %1069 = vrot.lane.b32.xlu0 %v1064, 64
    %v1070 = vpop.permute.xlu0 %1069
    %v1073 = vadd.f32 %v965, %v1068
    %v1074 = vadd.f32 %v966, %v1070
    %1077 = vrot.lane.b32.xlu0 %v1073, 64
    %v1078 = vpop.permute.xlu0 %1077
    %1079 = vrot.lane.b32.xlu0 %v1074, 64
    %v1080 = vpop.permute.xlu0 %1079
    %1083 = vst.msk [vmem:[#allocation11] sm:$0xff] %vm111, %v1078
    %1084 = vst.msk [vmem:[#allocation11 + $0x8] sm:$0xff] %vm111, %v1080
    // Predicated region
    $region54: #{tpu_custom_call.1} parent=1 // pred_check
      _
    $region55: #{tpu_custom_call.1} parent=1 // pred_check_branch
      %1086 = sbr.rel (0) target = $region57
    $region56: #{tpu_custom_call.1} parent=1 // pred_region
      %s1088 = ssub.s32 256, 256
      %1089 = vsyncadd [#allocation4], %s1088
      %s1090 = sshll.u32 [#allocation11], 4
      %s1091 = int_to_ptr.vmem [resolvable:$true] %s1090
      %1096 = dma.vmem_to_hbm [thread:$0]  %s1091, 256, %s8, [#allocation4], 128, 128, 8
    $region57: #{tpu_custom_call.1} parent=1 // pred_fallthru
      _
    // Predicated region
    $region58: #{tpu_custom_call.1} parent=1 // pred_check
      _
    $region59: #{tpu_custom_call.1} parent=1 // pred_check_branch
      %1098 = sbr.rel (0) target = $region61
    $region60: #{tpu_custom_call.1} parent=1 // pred_region
      %1099 = dma.done [#allocation4], 256
    $region61: #{tpu_custom_call.1} parent=1 // pred_fallthru
      _
    %1100 = vsyncpa [#allocation3], 1
    %1101 = vsyncpa [#allocation6], 1
    %1102 = vsyncpa [#allocation9], 1
    %1103 = vsyncpa [#allocation4], 1

</llo_original>
